<compile_context>
chip_gen: v7x
topology: tpu7x:2x2x1
jax: 0.10.0
libtpu: 0.0.40
codegen_flags: <defaults>
</compile_context>

<pallas_src>
import functools
import math

import jax
import jax.numpy as jnp
from jax.experimental import pallas as pl
from jax.experimental.pallas import tpu as pltpu


def _linformer_kernel(e_ref, mask_ref, q_ref, k_ref, v_ref, o_ref, *, scale):
    # Per grid point b: all heads of one batch are resident in VMEM.
    #   e_ref:    (H, lk, S)   projection matrices (shared across batches)
    #   mask_ref: (S, 1)       sequence mask for this batch
    #   q/k/v:    (H, S, D)    this batch's heads
    #   o_ref:    (S, H*D)     lane-dense output slab for this batch
    H, S, D = q_ref.shape
    m_col = mask_ref[...]                                   # (S, 1) f32

    outs = []
    for h in range(H):                                      # static unroll, H=4
        e_h = e_ref[h].astype(jnp.bfloat16)                 # (lk, S)

        # Mask padded positions, then project seq S -> linformer_k on the MXU.
        km = (k_ref[h] * m_col).astype(jnp.bfloat16)        # (S, D)
        vm = (v_ref[h] * m_col).astype(jnp.bfloat16)        # (S, D)
        kp = jnp.dot(e_h, km, preferred_element_type=jnp.float32)   # (lk, D)
        vp = jnp.dot(e_h, vm, preferred_element_type=jnp.float32)   # (lk, D)

        # Scaled dot-product attention in the projected (length-k) space.
        q_h = q_ref[h].astype(jnp.bfloat16)                 # (S, D)
        s = jax.lax.dot_general(
            q_h, kp.astype(jnp.bfloat16),
            (((1,), (1,)), ((), ())),                       # contract D with D
            preferred_element_type=jnp.float32)             # (S, lk)
        s = s * scale
        s = s - jnp.max(s, axis=-1, keepdims=True)
        p = jnp.exp(s)                                      # EUP, f32
        attn = p * pl.reciprocal(jnp.sum(p, axis=-1, keepdims=True), approx=True)

        x = jnp.dot(attn.astype(jnp.bfloat16), vp.astype(jnp.bfloat16),
                    preferred_element_type=jnp.float32)     # (S, D)
        outs.append(x)

    # Assemble the lane-dense (S, H*D) slab and store it in one go.
    o_ref[...] = jnp.concatenate(outs, axis=-1).astype(o_ref.dtype)


def linformer_attention(E, Q, K, V, mask):
    """E: [H,k,S], Q/K/V: [B,H,S,D], mask: [B,S] -> [B,H,S,D]."""
    B, H, S, D = Q.shape
    lk = E.shape[1]
    mask3 = mask.reshape(B, S, 1).astype(Q.dtype)

    kernel = functools.partial(_linformer_kernel, scale=1.0 / math.sqrt(D))

    out_flat = pl.pallas_call(
        kernel,
        out_shape=jax.ShapeDtypeStruct((B, S, H * D), Q.dtype),
        grid_spec=pl.GridSpec(
            grid=(B,),
            in_specs=[
                # E: constant block index -> fetched once, stays resident.
                pl.BlockSpec((H, lk, S), lambda b: (0, 0, 0)),
                pl.BlockSpec((pl.Squeezed(), S, 1), lambda b: (b, 0, 0)),        # mask
                pl.BlockSpec((pl.Squeezed(), H, S, D), lambda b: (b, 0, 0, 0)),  # Q
                pl.BlockSpec((pl.Squeezed(), H, S, D), lambda b: (b, 0, 0, 0)),  # K
                pl.BlockSpec((pl.Squeezed(), H, S, D), lambda b: (b, 0, 0, 0)),  # V
            ],
            out_specs=pl.BlockSpec((pl.Squeezed(), S, H * D), lambda b: (b, 0, 0)),
        ),
        compiler_params=pltpu.CompilerParams(
            dimension_semantics=("parallel",)),
    )(E, mask3, Q, K, V)

    # [B, S, H*D] -> [B, H, S, D] (layout plumbing outside the kernel).
    return jnp.transpose(out_flat.reshape(B, S, H, D), (0, 2, 1, 3))


def _reference(E, Q, K, V, mask):
    D = Q.shape[-1]
    km = K * mask[:, None, :, None]
    vm = V * mask[:, None, :, None]
    Kp = jnp.einsum("hks,bhsd->bhkd", E, km)
    Vp = jnp.einsum("hks,bhsd->bhkd", E, vm)
    dot = jnp.einsum("bhsd,bhkd->bhsk", Q, Kp) / math.sqrt(D)
    attn = jax.nn.softmax(dot, axis=-1)
    return jnp.einsum("bhsk,bhkd->bhsd", attn, Vp)


if __name__ == "__main__":
    # Module config (synthetic, deterministic init).
    num_head = 4
    head_dim = 32
    linformer_k = 8
    max_seq_len = 16
    batch = 2

    key = jax.random.PRNGKey(0)
    k_e, k_q, k_k, k_v, k_m = jax.random.split(key, 5)

    # projection_matrix = randn(H, k, S) / sqrt(k)
    E = jax.random.normal(k_e, (num_head, linformer_k, max_seq_len),
                          dtype=jnp.float32) / math.sqrt(linformer_k)

    Q = jax.random.normal(k_q, (batch, num_head, max_seq_len, head_dim),
                          dtype=jnp.float32)
    K = jax.random.normal(k_k, (batch, num_head, max_seq_len, head_dim),
                          dtype=jnp.float32)
    V = jax.random.normal(k_v, (batch, num_head, max_seq_len, head_dim),
                          dtype=jnp.float32)
    # Binary mask over sequence positions, [B, S].
    mask = (jax.random.uniform(k_m, (batch, max_seq_len)) > 0.25).astype(
        jnp.float32)

    out = linformer_attention(E, Q, K, V, mask)
    out = jax.block_until_ready(out)

    ref = _reference(E, Q, K, V, mask)
    assert out.shape == (batch, num_head, max_seq_len, head_dim)
    # Tolerance relaxed vs. pure-f32: matmul inputs are bf16 (f32 accumulate)
    # and the softmax denominator uses the EUP approximate reciprocal, which
    # together introduce ~1e-2-level differences against the f32 reference.
    assert jnp.allclose(out, ref, atol=5e-2, rtol=5e-2), (
        "Pallas output mismatch vs reference")

    print("KERNEL_OK")
</pallas_src>

<mosaic_0001>
module attributes {stable_mosaic.version = 11 : i64} {
  func.func @_linformer_kernel(%arg0: i32, %arg1: memref<4x8x16xf32, #tpu.memory_space<vmem>>, %arg2: memref<1x16x1xf32, #tpu.memory_space<vmem>>, %arg3: memref<1x4x16x32xf32, #tpu.memory_space<vmem>>, %arg4: memref<1x4x16x32xf32, #tpu.memory_space<vmem>>, %arg5: memref<1x4x16x32xf32, #tpu.memory_space<vmem>>, %arg6: memref<1x16x128xf32, #tpu.memory_space<vmem>>) attributes {dimension_semantics = [#tpu.dimension_semantics<parallel>], iteration_bounds = array<i64: 2>, scalar_prefetch = 0 : i64, scratch_operands = 0 : i64, tpu.core_type = #tpu.core_type<tc>, window_params = [{pipeline_mode = #tpu.pipeline_mode<synchronous>, transform_indices = @transform_0, window_bounds = array<i64: 4, 8, 16>}, {transform_indices = @transform_1, window_bounds = array<i64: 1, 16, 1>}, {transform_indices = @transform_2, window_bounds = array<i64: 1, 4, 16, 32>}, {transform_indices = @transform_3, window_bounds = array<i64: 1, 4, 16, 32>}, {transform_indices = @transform_4, window_bounds = array<i64: 1, 4, 16, 32>}, {transform_indices = @transform_5, window_bounds = array<i64: 1, 16, 128>}]} {
    %c0 = arith.constant 0 : index
    %c0_0 = arith.constant 0 : index
    %c0_1 = arith.constant 0 : index
    %0 = vector.load %arg2[%c0, %c0_0, %c0_1] : memref<1x16x1xf32, #tpu.memory_space<vmem>>, vector<1x16x1xf32>
    %1 = vector.shape_cast %0 : vector<1x16x1xf32> to vector<16x1xf32>
    %c0_2 = arith.constant 0 : index
    %c0_3 = arith.constant 0 : index
    %c0_4 = arith.constant 0 : index
    %2 = vector.load %arg1[%c0_2, %c0_3, %c0_4] : memref<4x8x16xf32, #tpu.memory_space<vmem>>, vector<1x8x16xf32>
    %3 = vector.shape_cast %2 : vector<1x8x16xf32> to vector<8x16xf32>
    %4 = arith.truncf %3 : vector<8x16xf32> to vector<8x16xbf16>
    %c0_5 = arith.constant 0 : index
    %c0_6 = arith.constant 0 : index
    %c0_7 = arith.constant 0 : index
    %c0_8 = arith.constant 0 : index
    %5 = vector.load %arg4[%c0_5, %c0_6, %c0_7, %c0_8] : memref<1x4x16x32xf32, #tpu.memory_space<vmem>>, vector<1x1x16x32xf32>
    %6 = vector.shape_cast %5 : vector<1x1x16x32xf32> to vector<16x32xf32>
    %7 = vector.broadcast %1 : vector<16x1xf32> to vector<16x32xf32>
    %8 = arith.mulf %6, %7 : vector<16x32xf32>
    %9 = arith.truncf %8 : vector<16x32xf32> to vector<16x32xbf16>
    %c0_9 = arith.constant 0 : index
    %c0_10 = arith.constant 0 : index
    %c0_11 = arith.constant 0 : index
    %c0_12 = arith.constant 0 : index
    %10 = vector.load %arg5[%c0_9, %c0_10, %c0_11, %c0_12] : memref<1x4x16x32xf32, #tpu.memory_space<vmem>>, vector<1x1x16x32xf32>
    %11 = vector.shape_cast %10 : vector<1x1x16x32xf32> to vector<16x32xf32>
    %12 = vector.broadcast %1 : vector<16x1xf32> to vector<16x32xf32>
    %13 = arith.mulf %11, %12 : vector<16x32xf32>
    %14 = arith.truncf %13 : vector<16x32xf32> to vector<16x32xbf16>
    %cst = arith.constant dense<0.000000e+00> : vector<8x32xf32>
    %15 = tpu.matmul %4, %9, %cst {dimension_numbers = #tpu.dot_dimension_numbers<[1], [0], [0], [1], [0, 0, 1, 1], [], []>} : vector<8x16xbf16>, vector<16x32xbf16>, vector<8x32xf32> -> vector<8x32xf32>
    %cst_13 = arith.constant dense<0.000000e+00> : vector<8x32xf32>
    %16 = tpu.matmul %4, %14, %cst_13 {dimension_numbers = #tpu.dot_dimension_numbers<[1], [0], [0], [1], [0, 0, 1, 1], [], []>} : vector<8x16xbf16>, vector<16x32xbf16>, vector<8x32xf32> -> vector<8x32xf32>
    %c0_14 = arith.constant 0 : index
    %c0_15 = arith.constant 0 : index
    %c0_16 = arith.constant 0 : index
    %c0_17 = arith.constant 0 : index
    %17 = vector.load %arg3[%c0_14, %c0_15, %c0_16, %c0_17] : memref<1x4x16x32xf32, #tpu.memory_space<vmem>>, vector<1x1x16x32xf32>
    %18 = vector.shape_cast %17 : vector<1x1x16x32xf32> to vector<16x32xf32>
    %19 = arith.truncf %18 : vector<16x32xf32> to vector<16x32xbf16>
    %20 = arith.truncf %15 : vector<8x32xf32> to vector<8x32xbf16>
    %cst_18 = arith.constant dense<0.000000e+00> : vector<16x8xf32>
    %21 = tpu.matmul %19, %20, %cst_18 {dimension_numbers = #tpu.dot_dimension_numbers<[1], [1], [0], [0], [0, 0, 1, 0], [], []>} : vector<16x32xbf16>, vector<8x32xbf16>, vector<16x8xf32> -> vector<16x8xf32>
    %cst_19 = arith.constant 0.176776692 : f32
    %22 = vector.broadcast %cst_19 : f32 to vector<16x8xf32>
    %23 = arith.mulf %21, %22 : vector<16x8xf32>
    %cst_20 = arith.constant dense<0xFF800000> : vector<16xf32>
    %24 = vector.multi_reduction <maximumf>, %23, %cst_20 [1] : vector<16x8xf32> to vector<16xf32>
    %25 = vector.shape_cast %24 : vector<16xf32> to vector<16x1xf32>
    %26 = vector.broadcast %25 : vector<16x1xf32> to vector<16x8xf32>
    %27 = arith.subf %23, %26 : vector<16x8xf32>
    %28 = math.exp %27 : vector<16x8xf32>
    %cst_21 = arith.constant dense<0.000000e+00> : vector<16xf32>
    %29 = vector.multi_reduction <add>, %28, %cst_21 [1] : vector<16x8xf32> to vector<16xf32>
    %30 = vector.shape_cast %29 : vector<16xf32> to vector<16x1xf32>
    %31 = tpu.reciprocal %30 {approx = true} : vector<16x1xf32> -> vector<16x1xf32>
    %32 = vector.broadcast %31 : vector<16x1xf32> to vector<16x8xf32>
    %33 = arith.mulf %28, %32 : vector<16x8xf32>
    %34 = arith.truncf %33 : vector<16x8xf32> to vector<16x8xbf16>
    %35 = arith.truncf %16 : vector<8x32xf32> to vector<8x32xbf16>
    %cst_22 = arith.constant dense<0.000000e+00> : vector<16x32xf32>
    %36 = tpu.matmul %34, %35, %cst_22 {dimension_numbers = #tpu.dot_dimension_numbers<[1], [0], [0], [1], [0, 0, 1, 1], [], []>} : vector<16x8xbf16>, vector<8x32xbf16>, vector<16x32xf32> -> vector<16x32xf32>
    %c1 = arith.constant 1 : index
    %c0_23 = arith.constant 0 : index
    %c0_24 = arith.constant 0 : index
    %37 = vector.load %arg1[%c1, %c0_23, %c0_24] : memref<4x8x16xf32, #tpu.memory_space<vmem>>, vector<1x8x16xf32>
    %38 = vector.shape_cast %37 : vector<1x8x16xf32> to vector<8x16xf32>
    %39 = arith.truncf %38 : vector<8x16xf32> to vector<8x16xbf16>
    %c0_25 = arith.constant 0 : index
    %c1_26 = arith.constant 1 : index
    %c0_27 = arith.constant 0 : index
    %c0_28 = arith.constant 0 : index
    %40 = vector.load %arg4[%c0_25, %c1_26, %c0_27, %c0_28] : memref<1x4x16x32xf32, #tpu.memory_space<vmem>>, vector<1x1x16x32xf32>
    %41 = vector.shape_cast %40 : vector<1x1x16x32xf32> to vector<16x32xf32>
    %42 = vector.broadcast %1 : vector<16x1xf32> to vector<16x32xf32>
    %43 = arith.mulf %41, %42 : vector<16x32xf32>
    %44 = arith.truncf %43 : vector<16x32xf32> to vector<16x32xbf16>
    %c0_29 = arith.constant 0 : index
    %c1_30 = arith.constant 1 : index
    %c0_31 = arith.constant 0 : index
    %c0_32 = arith.constant 0 : index
    %45 = vector.load %arg5[%c0_29, %c1_30, %c0_31, %c0_32] : memref<1x4x16x32xf32, #tpu.memory_space<vmem>>, vector<1x1x16x32xf32>
    %46 = vector.shape_cast %45 : vector<1x1x16x32xf32> to vector<16x32xf32>
    %47 = vector.broadcast %1 : vector<16x1xf32> to vector<16x32xf32>
    %48 = arith.mulf %46, %47 : vector<16x32xf32>
    %49 = arith.truncf %48 : vector<16x32xf32> to vector<16x32xbf16>
    %cst_33 = arith.constant dense<0.000000e+00> : vector<8x32xf32>
    %50 = tpu.matmul %39, %44, %cst_33 {dimension_numbers = #tpu.dot_dimension_numbers<[1], [0], [0], [1], [0, 0, 1, 1], [], []>} : vector<8x16xbf16>, vector<16x32xbf16>, vector<8x32xf32> -> vector<8x32xf32>
    %cst_34 = arith.constant dense<0.000000e+00> : vector<8x32xf32>
    %51 = tpu.matmul %39, %49, %cst_34 {dimension_numbers = #tpu.dot_dimension_numbers<[1], [0], [0], [1], [0, 0, 1, 1], [], []>} : vector<8x16xbf16>, vector<16x32xbf16>, vector<8x32xf32> -> vector<8x32xf32>
    %c0_35 = arith.constant 0 : index
    %c1_36 = arith.constant 1 : index
    %c0_37 = arith.constant 0 : index
    %c0_38 = arith.constant 0 : index
    %52 = vector.load %arg3[%c0_35, %c1_36, %c0_37, %c0_38] : memref<1x4x16x32xf32, #tpu.memory_space<vmem>>, vector<1x1x16x32xf32>
    %53 = vector.shape_cast %52 : vector<1x1x16x32xf32> to vector<16x32xf32>
    %54 = arith.truncf %53 : vector<16x32xf32> to vector<16x32xbf16>
    %55 = arith.truncf %50 : vector<8x32xf32> to vector<8x32xbf16>
    %cst_39 = arith.constant dense<0.000000e+00> : vector<16x8xf32>
    %56 = tpu.matmul %54, %55, %cst_39 {dimension_numbers = #tpu.dot_dimension_numbers<[1], [1], [0], [0], [0, 0, 1, 0], [], []>} : vector<16x32xbf16>, vector<8x32xbf16>, vector<16x8xf32> -> vector<16x8xf32>
    %cst_40 = arith.constant 0.176776692 : f32
    %57 = vector.broadcast %cst_40 : f32 to vector<16x8xf32>
    %58 = arith.mulf %56, %57 : vector<16x8xf32>
    %cst_41 = arith.constant dense<0xFF800000> : vector<16xf32>
    %59 = vector.multi_reduction <maximumf>, %58, %cst_41 [1] : vector<16x8xf32> to vector<16xf32>
    %60 = vector.shape_cast %59 : vector<16xf32> to vector<16x1xf32>
    %61 = vector.broadcast %60 : vector<16x1xf32> to vector<16x8xf32>
    %62 = arith.subf %58, %61 : vector<16x8xf32>
    %63 = math.exp %62 : vector<16x8xf32>
    %cst_42 = arith.constant dense<0.000000e+00> : vector<16xf32>
    %64 = vector.multi_reduction <add>, %63, %cst_42 [1] : vector<16x8xf32> to vector<16xf32>
    %65 = vector.shape_cast %64 : vector<16xf32> to vector<16x1xf32>
    %66 = tpu.reciprocal %65 {approx = true} : vector<16x1xf32> -> vector<16x1xf32>
    %67 = vector.broadcast %66 : vector<16x1xf32> to vector<16x8xf32>
    %68 = arith.mulf %63, %67 : vector<16x8xf32>
    %69 = arith.truncf %68 : vector<16x8xf32> to vector<16x8xbf16>
    %70 = arith.truncf %51 : vector<8x32xf32> to vector<8x32xbf16>
    %cst_43 = arith.constant dense<0.000000e+00> : vector<16x32xf32>
    %71 = tpu.matmul %69, %70, %cst_43 {dimension_numbers = #tpu.dot_dimension_numbers<[1], [0], [0], [1], [0, 0, 1, 1], [], []>} : vector<16x8xbf16>, vector<8x32xbf16>, vector<16x32xf32> -> vector<16x32xf32>
    %c2 = arith.constant 2 : index
    %c0_44 = arith.constant 0 : index
    %c0_45 = arith.constant 0 : index
    %72 = vector.load %arg1[%c2, %c0_44, %c0_45] : memref<4x8x16xf32, #tpu.memory_space<vmem>>, vector<1x8x16xf32>
    %73 = vector.shape_cast %72 : vector<1x8x16xf32> to vector<8x16xf32>
    %74 = arith.truncf %73 : vector<8x16xf32> to vector<8x16xbf16>
    %c0_46 = arith.constant 0 : index
    %c2_47 = arith.constant 2 : index
    %c0_48 = arith.constant 0 : index
    %c0_49 = arith.constant 0 : index
    %75 = vector.load %arg4[%c0_46, %c2_47, %c0_48, %c0_49] : memref<1x4x16x32xf32, #tpu.memory_space<vmem>>, vector<1x1x16x32xf32>
    %76 = vector.shape_cast %75 : vector<1x1x16x32xf32> to vector<16x32xf32>
    %77 = vector.broadcast %1 : vector<16x1xf32> to vector<16x32xf32>
    %78 = arith.mulf %76, %77 : vector<16x32xf32>
    %79 = arith.truncf %78 : vector<16x32xf32> to vector<16x32xbf16>
    %c0_50 = arith.constant 0 : index
    %c2_51 = arith.constant 2 : index
    %c0_52 = arith.constant 0 : index
    %c0_53 = arith.constant 0 : index
    %80 = vector.load %arg5[%c0_50, %c2_51, %c0_52, %c0_53] : memref<1x4x16x32xf32, #tpu.memory_space<vmem>>, vector<1x1x16x32xf32>
    %81 = vector.shape_cast %80 : vector<1x1x16x32xf32> to vector<16x32xf32>
    %82 = vector.broadcast %1 : vector<16x1xf32> to vector<16x32xf32>
    %83 = arith.mulf %81, %82 : vector<16x32xf32>
    %84 = arith.truncf %83 : vector<16x32xf32> to vector<16x32xbf16>
    %cst_54 = arith.constant dense<0.000000e+00> : vector<8x32xf32>
    %85 = tpu.matmul %74, %79, %cst_54 {dimension_numbers = #tpu.dot_dimension_numbers<[1], [0], [0], [1], [0, 0, 1, 1], [], []>} : vector<8x16xbf16>, vector<16x32xbf16>, vector<8x32xf32> -> vector<8x32xf32>
    %cst_55 = arith.constant dense<0.000000e+00> : vector<8x32xf32>
    %86 = tpu.matmul %74, %84, %cst_55 {dimension_numbers = #tpu.dot_dimension_numbers<[1], [0], [0], [1], [0, 0, 1, 1], [], []>} : vector<8x16xbf16>, vector<16x32xbf16>, vector<8x32xf32> -> vector<8x32xf32>
    %c0_56 = arith.constant 0 : index
    %c2_57 = arith.constant 2 : index
    %c0_58 = arith.constant 0 : index
    %c0_59 = arith.constant 0 : index
    %87 = vector.load %arg3[%c0_56, %c2_57, %c0_58, %c0_59] : memref<1x4x16x32xf32, #tpu.memory_space<vmem>>, vector<1x1x16x32xf32>
    %88 = vector.shape_cast %87 : vector<1x1x16x32xf32> to vector<16x32xf32>
    %89 = arith.truncf %88 : vector<16x32xf32> to vector<16x32xbf16>
    %90 = arith.truncf %85 : vector<8x32xf32> to vector<8x32xbf16>
    %cst_60 = arith.constant dense<0.000000e+00> : vector<16x8xf32>
    %91 = tpu.matmul %89, %90, %cst_60 {dimension_numbers = #tpu.dot_dimension_numbers<[1], [1], [0], [0], [0, 0, 1, 0], [], []>} : vector<16x32xbf16>, vector<8x32xbf16>, vector<16x8xf32> -> vector<16x8xf32>
    %cst_61 = arith.constant 0.176776692 : f32
    %92 = vector.broadcast %cst_61 : f32 to vector<16x8xf32>
    %93 = arith.mulf %91, %92 : vector<16x8xf32>
    %cst_62 = arith.constant dense<0xFF800000> : vector<16xf32>
    %94 = vector.multi_reduction <maximumf>, %93, %cst_62 [1] : vector<16x8xf32> to vector<16xf32>
    %95 = vector.shape_cast %94 : vector<16xf32> to vector<16x1xf32>
    %96 = vector.broadcast %95 : vector<16x1xf32> to vector<16x8xf32>
    %97 = arith.subf %93, %96 : vector<16x8xf32>
    %98 = math.exp %97 : vector<16x8xf32>
    %cst_63 = arith.constant dense<0.000000e+00> : vector<16xf32>
    %99 = vector.multi_reduction <add>, %98, %cst_63 [1] : vector<16x8xf32> to vector<16xf32>
    %100 = vector.shape_cast %99 : vector<16xf32> to vector<16x1xf32>
    %101 = tpu.reciprocal %100 {approx = true} : vector<16x1xf32> -> vector<16x1xf32>
    %102 = vector.broadcast %101 : vector<16x1xf32> to vector<16x8xf32>
    %103 = arith.mulf %98, %102 : vector<16x8xf32>
    %104 = arith.truncf %103 : vector<16x8xf32> to vector<16x8xbf16>
    %105 = arith.truncf %86 : vector<8x32xf32> to vector<8x32xbf16>
    %cst_64 = arith.constant dense<0.000000e+00> : vector<16x32xf32>
    %106 = tpu.matmul %104, %105, %cst_64 {dimension_numbers = #tpu.dot_dimension_numbers<[1], [0], [0], [1], [0, 0, 1, 1], [], []>} : vector<16x8xbf16>, vector<8x32xbf16>, vector<16x32xf32> -> vector<16x32xf32>
    %c3 = arith.constant 3 : index
    %c0_65 = arith.constant 0 : index
    %c0_66 = arith.constant 0 : index
    %107 = vector.load %arg1[%c3, %c0_65, %c0_66] : memref<4x8x16xf32, #tpu.memory_space<vmem>>, vector<1x8x16xf32>
    %108 = vector.shape_cast %107 : vector<1x8x16xf32> to vector<8x16xf32>
    %109 = arith.truncf %108 : vector<8x16xf32> to vector<8x16xbf16>
    %c0_67 = arith.constant 0 : index
    %c3_68 = arith.constant 3 : index
    %c0_69 = arith.constant 0 : index
    %c0_70 = arith.constant 0 : index
    %110 = vector.load %arg4[%c0_67, %c3_68, %c0_69, %c0_70] : memref<1x4x16x32xf32, #tpu.memory_space<vmem>>, vector<1x1x16x32xf32>
    %111 = vector.shape_cast %110 : vector<1x1x16x32xf32> to vector<16x32xf32>
    %112 = vector.broadcast %1 : vector<16x1xf32> to vector<16x32xf32>
    %113 = arith.mulf %111, %112 : vector<16x32xf32>
    %114 = arith.truncf %113 : vector<16x32xf32> to vector<16x32xbf16>
    %c0_71 = arith.constant 0 : index
    %c3_72 = arith.constant 3 : index
    %c0_73 = arith.constant 0 : index
    %c0_74 = arith.constant 0 : index
    %115 = vector.load %arg5[%c0_71, %c3_72, %c0_73, %c0_74] : memref<1x4x16x32xf32, #tpu.memory_space<vmem>>, vector<1x1x16x32xf32>
    %116 = vector.shape_cast %115 : vector<1x1x16x32xf32> to vector<16x32xf32>
    %117 = vector.broadcast %1 : vector<16x1xf32> to vector<16x32xf32>
    %118 = arith.mulf %116, %117 : vector<16x32xf32>
    %119 = arith.truncf %118 : vector<16x32xf32> to vector<16x32xbf16>
    %cst_75 = arith.constant dense<0.000000e+00> : vector<8x32xf32>
    %120 = tpu.matmul %109, %114, %cst_75 {dimension_numbers = #tpu.dot_dimension_numbers<[1], [0], [0], [1], [0, 0, 1, 1], [], []>} : vector<8x16xbf16>, vector<16x32xbf16>, vector<8x32xf32> -> vector<8x32xf32>
    %cst_76 = arith.constant dense<0.000000e+00> : vector<8x32xf32>
    %121 = tpu.matmul %109, %119, %cst_76 {dimension_numbers = #tpu.dot_dimension_numbers<[1], [0], [0], [1], [0, 0, 1, 1], [], []>} : vector<8x16xbf16>, vector<16x32xbf16>, vector<8x32xf32> -> vector<8x32xf32>
    %c0_77 = arith.constant 0 : index
    %c3_78 = arith.constant 3 : index
    %c0_79 = arith.constant 0 : index
    %c0_80 = arith.constant 0 : index
    %122 = vector.load %arg3[%c0_77, %c3_78, %c0_79, %c0_80] : memref<1x4x16x32xf32, #tpu.memory_space<vmem>>, vector<1x1x16x32xf32>
    %123 = vector.shape_cast %122 : vector<1x1x16x32xf32> to vector<16x32xf32>
    %124 = arith.truncf %123 : vector<16x32xf32> to vector<16x32xbf16>
    %125 = arith.truncf %120 : vector<8x32xf32> to vector<8x32xbf16>
    %cst_81 = arith.constant dense<0.000000e+00> : vector<16x8xf32>
    %126 = tpu.matmul %124, %125, %cst_81 {dimension_numbers = #tpu.dot_dimension_numbers<[1], [1], [0], [0], [0, 0, 1, 0], [], []>} : vector<16x32xbf16>, vector<8x32xbf16>, vector<16x8xf32> -> vector<16x8xf32>
    %cst_82 = arith.constant 0.176776692 : f32
    %127 = vector.broadcast %cst_82 : f32 to vector<16x8xf32>
    %128 = arith.mulf %126, %127 : vector<16x8xf32>
    %cst_83 = arith.constant dense<0xFF800000> : vector<16xf32>
    %129 = vector.multi_reduction <maximumf>, %128, %cst_83 [1] : vector<16x8xf32> to vector<16xf32>
    %130 = vector.shape_cast %129 : vector<16xf32> to vector<16x1xf32>
    %131 = vector.broadcast %130 : vector<16x1xf32> to vector<16x8xf32>
    %132 = arith.subf %128, %131 : vector<16x8xf32>
    %133 = math.exp %132 : vector<16x8xf32>
    %cst_84 = arith.constant dense<0.000000e+00> : vector<16xf32>
    %134 = vector.multi_reduction <add>, %133, %cst_84 [1] : vector<16x8xf32> to vector<16xf32>
    %135 = vector.shape_cast %134 : vector<16xf32> to vector<16x1xf32>
    %136 = tpu.reciprocal %135 {approx = true} : vector<16x1xf32> -> vector<16x1xf32>
    %137 = vector.broadcast %136 : vector<16x1xf32> to vector<16x8xf32>
    %138 = arith.mulf %133, %137 : vector<16x8xf32>
    %139 = arith.truncf %138 : vector<16x8xf32> to vector<16x8xbf16>
    %140 = arith.truncf %121 : vector<8x32xf32> to vector<8x32xbf16>
    %cst_85 = arith.constant dense<0.000000e+00> : vector<16x32xf32>
    %141 = tpu.matmul %139, %140, %cst_85 {dimension_numbers = #tpu.dot_dimension_numbers<[1], [0], [0], [1], [0, 0, 1, 1], [], []>} : vector<16x8xbf16>, vector<8x32xbf16>, vector<16x32xf32> -> vector<16x32xf32>
    %142 = tpu.concatenate %36, %71, %106, %141 in 1 : vector<16x32xf32>, vector<16x32xf32>, vector<16x32xf32>, vector<16x32xf32> -> vector<16x128xf32>
    %c0_86 = arith.constant 0 : index
    %c0_87 = arith.constant 0 : index
    %c0_88 = arith.constant 0 : index
    %143 = vector.load %arg6[%c0_86, %c0_87, %c0_88] : memref<1x16x128xf32, #tpu.memory_space<vmem>>, vector<1x16x128xf32>
    %144 = vector.shape_cast %143 : vector<1x16x128xf32> to vector<16x128xf32>
    %145 = vector.shape_cast %142 : vector<16x128xf32> to vector<1x16x128xf32>
    tpu.vector_store %arg6[%c0_86, %c0_87, %c0_88], %145 {strides = array<i32>} : memref<1x16x128xf32, #tpu.memory_space<vmem>>, vector<1x16x128xf32>,
    return
  }
  func.func @transform_0(%arg0: i32) -> (i32, i32, i32) {
    %c0_i32 = arith.constant 0 : i32
    %c0_i32_0 = arith.constant 0 : i32
    %c0_i32_1 = arith.constant 0 : i32
    %c0_i32_2 = arith.constant 0 : i32
    return %c0_i32, %c0_i32_0, %c0_i32_1 : i32, i32, i32
  }
  func.func @transform_1(%arg0: i32) -> (i32, i32, i32) {
    %c0_i32 = arith.constant 0 : i32
    %c0_i32_0 = arith.constant 0 : i32
    %c0_i32_1 = arith.constant 0 : i32
    return %arg0, %c0_i32, %c0_i32_0 : i32, i32, i32
  }
  func.func @transform_2(%arg0: i32) -> (i32, i32, i32, i32) {
    %c0_i32 = arith.constant 0 : i32
    %c0_i32_0 = arith.constant 0 : i32
    %c0_i32_1 = arith.constant 0 : i32
    %c0_i32_2 = arith.constant 0 : i32
    return %arg0, %c0_i32, %c0_i32_0, %c0_i32_1 : i32, i32, i32, i32
  }
  func.func @transform_3(%arg0: i32) -> (i32, i32, i32, i32) {
    %c0_i32 = arith.constant 0 : i32
    %c0_i32_0 = arith.constant 0 : i32
    %c0_i32_1 = arith.constant 0 : i32
    %c0_i32_2 = arith.constant 0 : i32
    return %arg0, %c0_i32, %c0_i32_0, %c0_i32_1 : i32, i32, i32, i32
  }
  func.func @transform_4(%arg0: i32) -> (i32, i32, i32, i32) {
    %c0_i32 = arith.constant 0 : i32
    %c0_i32_0 = arith.constant 0 : i32
    %c0_i32_1 = arith.constant 0 : i32
    %c0_i32_2 = arith.constant 0 : i32
    return %arg0, %c0_i32, %c0_i32_0, %c0_i32_1 : i32, i32, i32, i32
  }
  func.func @transform_5(%arg0: i32) -> (i32, i32, i32) {
    %c0_i32 = arith.constant 0 : i32
    %c0_i32_0 = arith.constant 0 : i32
    %c0_i32_1 = arith.constant 0 : i32
    return %arg0, %c0_i32, %c0_i32_0 : i32, i32, i32
  }
}

</mosaic_0001>

<llo_original>
// kernel: tpu_custom_call.1
$region0: #{tpu_custom_call.1}
  #allocation0 [shape = 'u32[]', space=smem, size = 0x4, offset = 0x4, fixed_abs, tag = 'smem constant byte address 0x4 - core index']
  #allocation1 [shape = 'u32[144,128]{1,0:T(1,128)}', space=vmem, size = 0x12000, scoped, tag = 'internal scratch']
  %s0 = inlined_call_operand.vmem [shape: f32[4,8,16], index: 0, kind: input, shape index: {}]
  %s1 = inlined_call_operand.vmem [shape: f32[2,16,1], index: 1, kind: input, shape index: {}]
  %s2 = inlined_call_operand.hbm [shape: f32[2,4,16,32], index: 2, kind: input, shape index: {}]
  %s3 = inlined_call_operand.hbm [shape: f32[2,4,16,32], index: 3, kind: input, shape index: {}]
  %s4 = inlined_call_operand.hbm [shape: f32[2,4,16,32], index: 4, kind: input, shape index: {}]
  %s5 = inlined_call_operand.hbm [shape: f32[2,16,128], index: 5, kind: output, shape index: {}]
  %s6 = sld [smem:[#allocation0]]
  $region65: #{tpu_custom_call.1} parent=0
    _
  %s8 = ssub.s32 1, %s6
  %s9 = scalar_select 0, %s8, %s6
  $region1: #{tpu_custom_call.1} parent=0
    #allocation2 [shape = 'u8[65536]{0}', space=vmem, size = 0x10000, scoped, tag = 'input window, operand 2']
    #allocation3 [shape = 's32[2]{0}', space=sflag, size = 0x8, scoped, tag = 'scoped memory for tpu_custom_call.1']
    #allocation4 [shape = 's32[2]{0}', space=sflag, size = 0x8, scoped, tag = 'scoped memory for tpu_custom_call.1']
    #allocation5 [shape = 'u8[65536]{0}', space=vmem, size = 0x10000, scoped, tag = 'input window, operand 3']
    #allocation6 [shape = 's32[2]{0}', space=sflag, size = 0x8, scoped, tag = 'scoped memory for tpu_custom_call.1']
    #allocation7 [shape = 'u8[65536]{0}', space=vmem, size = 0x10000, scoped, tag = 'input window, operand 4']
    #allocation8 [shape = 'u8[16384]{0}', space=vmem, size = 0x4000, scoped, tag = 'output window, operand 0']
    %10 = vsyncpa [#allocation3], 0
    %s11 = scalar_lea.sflag [#allocation3], 1
    %12 = vsyncpa %s11, 0
    %13 = vsyncpa [#allocation6], 0
    %s14 = scalar_lea.sflag [#allocation6], 1
    %15 = vsyncpa %s14, 0
    %16 = vsyncpa [#allocation4], 0
    %s17 = scalar_lea.sflag [#allocation4], 1
    %18 = vsyncpa %s17, 0
    loop: start=0, step=1, limit=4
    $region2: #{tpu_custom_call.1} parent=1 // loop_pre_header
      _
    $region3: #{tpu_custom_call.1} parent=1 // loop_header
      %s20 = sphi 0, %s24
      %p21 = scmp.ge.s32.totalorder %s20, 4
      %s28 = sphi 0, %s28
      %s30 = sphi 0, %s28
      %s31 = sphi 0, %s30
      %s45 = sphi 0, %s31
      %s51 = sphi 0, %s53
      %s54 = sphi 0, %s51
      %s55 = sphi 0, %s54
      %s71 = sphi 0, %s55
      %s77 = sphi 0, %s79
      %s80 = sphi 0, %s77
      %s81 = sphi 0, %s80
      %s97 = sphi 0, %s81
      %s103 = sphi 0, %s105
      %s106 = sphi 0, %s103
      %s107 = sphi 0, %s106
      %s123 = sphi 0, %s107
      %s129 = sphi 0, %s131
      %s132 = sphi 0, %s129
      %s133 = sphi 0, %s132
      %s149 = sphi 0, %s133
      %s155 = sphi 0, %s157
      %s158 = sphi 0, %s155
      %s159 = sphi 0, %s158
      %s175 = sphi 0, %s159
    $region4: #{tpu_custom_call.1} parent=1 // loop_header_branch
      %23 = sbr.rel (%p21) target = $region8
    $region5: #{tpu_custom_call.1} parent=1 // loop_body
      %s25 = ssub.s32 %s20, 1
      %s26 = ssub.s32 %s20, 2
      %s27 = sadd.s32 %s20, 1
      %s29 = sadd.s32 %s28, 1
      %p32 = scmp.eq.s32.totalorder %s20, 1
      %p33 = scmp.ne.s32.totalorder %s28, %s30
      %p34 = scmp.eq.s32.totalorder %s20, 0
      %p35 = por %p33, %p34
      %p36 = scmp.ne.s32.totalorder %s28, %s30
      %p37 = scmp.eq.s32.totalorder %s25, 1
      %p38 = por %p36, %p37
      %p39 = scmp.ne.s32.totalorder %s30, %s31
      %p40 = scmp.eq.s32.totalorder %s25, 0
      %p41 = por %p39, %p40
      %p42 = scmp.ne.s32.totalorder %s30, %s31
      %p43 = scmp.eq.s32.totalorder %s26, 1
      %p44 = por %p42, %p43
      %p46 = scmp.ne.s32.totalorder %s31, %s45
      %p47 = scmp.eq.s32.totalorder %s26, 0
      %p48 = por %p46, %p47
      %s49 = ssub.s32 %s20, %s27
      %p50 = scmp.eq.s32.totalorder %s49, 0
      %s52 = sadd.s32 %s51, 1
      %s53 = scalar_select %p50, %s51, %s52
      %p56 = pneg %p50
      %p57 = scmp.eq.s32.totalorder %s20, 1
      %p58 = por %p56, %p57
      %p59 = scmp.ne.s32.totalorder %s51, %s54
      %p60 = scmp.eq.s32.totalorder %s20, 0
      %p61 = por %p59, %p60
      %p62 = scmp.ne.s32.totalorder %s51, %s54
      %p63 = scmp.eq.s32.totalorder %s25, 1
      %p64 = por %p62, %p63
      %p65 = scmp.ne.s32.totalorder %s54, %s55
      %p66 = scmp.eq.s32.totalorder %s25, 0
      %p67 = por %p65, %p66
      %p68 = scmp.ne.s32.totalorder %s54, %s55
      %p69 = scmp.eq.s32.totalorder %s26, 1
      %p70 = por %p68, %p69
      %p72 = scmp.ne.s32.totalorder %s55, %s71
      %p73 = scmp.eq.s32.totalorder %s26, 0
      %p74 = por %p72, %p73
      %s75 = ssub.s32 %s20, %s27
      %p76 = scmp.eq.s32.totalorder %s75, 0
      %s78 = sadd.s32 %s77, 1
      %s79 = scalar_select %p76, %s77, %s78
      %p82 = pneg %p76
      %p83 = scmp.eq.s32.totalorder %s20, 1
      %p84 = por %p82, %p83
      %p85 = scmp.ne.s32.totalorder %s77, %s80
      %p86 = scmp.eq.s32.totalorder %s20, 0
      %p87 = por %p85, %p86
      %p88 = scmp.ne.s32.totalorder %s77, %s80
      %p89 = scmp.eq.s32.totalorder %s25, 1
      %p90 = por %p88, %p89
      %p91 = scmp.ne.s32.totalorder %s80, %s81
      %p92 = scmp.eq.s32.totalorder %s25, 0
      %p93 = por %p91, %p92
      %p94 = scmp.ne.s32.totalorder %s80, %s81
      %p95 = scmp.eq.s32.totalorder %s26, 1
      %p96 = por %p94, %p95
      %p98 = scmp.ne.s32.totalorder %s81, %s97
      %p99 = scmp.eq.s32.totalorder %s26, 0
      %p100 = por %p98, %p99
      %s101 = ssub.s32 %s20, %s27
      %p102 = scmp.eq.s32.totalorder %s101, 0
      %s104 = sadd.s32 %s103, 1
      %s105 = scalar_select %p102, %s103, %s104
      %p108 = pneg %p102
      %p109 = scmp.eq.s32.totalorder %s20, 1
      %p110 = por %p108, %p109
      %p111 = scmp.ne.s32.totalorder %s103, %s106
      %p112 = scmp.eq.s32.totalorder %s20, 0
      %p113 = por %p111, %p112
      %p114 = scmp.ne.s32.totalorder %s103, %s106
      %p115 = scmp.eq.s32.totalorder %s25, 1
      %p116 = por %p114, %p115
      %p117 = scmp.ne.s32.totalorder %s106, %s107
      %p118 = scmp.eq.s32.totalorder %s25, 0
      %p119 = por %p117, %p118
      %p120 = scmp.ne.s32.totalorder %s106, %s107
      %p121 = scmp.eq.s32.totalorder %s26, 1
      %p122 = por %p120, %p121
      %p124 = scmp.ne.s32.totalorder %s107, %s123
      %p125 = scmp.eq.s32.totalorder %s26, 0
      %p126 = por %p124, %p125
      %s127 = ssub.s32 %s20, %s27
      %p128 = scmp.eq.s32.totalorder %s127, 0
      %s130 = sadd.s32 %s129, 1
      %s131 = scalar_select %p128, %s129, %s130
      %p134 = pneg %p128
      %p135 = scmp.eq.s32.totalorder %s20, 1
      %p136 = por %p134, %p135
      %p137 = scmp.ne.s32.totalorder %s129, %s132
      %p138 = scmp.eq.s32.totalorder %s20, 0
      %p139 = por %p137, %p138
      %p140 = scmp.ne.s32.totalorder %s129, %s132
      %p141 = scmp.eq.s32.totalorder %s25, 1
      %p142 = por %p140, %p141
      %p143 = scmp.ne.s32.totalorder %s132, %s133
      %p144 = scmp.eq.s32.totalorder %s25, 0
      %p145 = por %p143, %p144
      %p146 = scmp.ne.s32.totalorder %s132, %s133
      %p147 = scmp.eq.s32.totalorder %s26, 1
      %p148 = por %p146, %p147
      %p150 = scmp.ne.s32.totalorder %s133, %s149
      %p151 = scmp.eq.s32.totalorder %s26, 0
      %p152 = por %p150, %p151
      %s153 = ssub.s32 %s20, %s27
      %p154 = scmp.eq.s32.totalorder %s153, 0
      %s156 = sadd.s32 %s155, 1
      %s157 = scalar_select %p154, %s155, %s156
      %p160 = pneg %p154
      %p161 = scmp.eq.s32.totalorder %s20, 1
      %p162 = por %p160, %p161
      %p163 = scmp.ne.s32.totalorder %s155, %s158
      %p164 = scmp.eq.s32.totalorder %s20, 0
      %p165 = por %p163, %p164
      %p166 = scmp.ne.s32.totalorder %s155, %s158
      %p167 = scmp.eq.s32.totalorder %s25, 1
      %p168 = por %p166, %p167
      %p169 = scmp.ne.s32.totalorder %s158, %s159
      %p170 = scmp.eq.s32.totalorder %s25, 0
      %p171 = por %p169, %p170
      %p172 = scmp.ne.s32.totalorder %s158, %s159
      %p173 = scmp.eq.s32.totalorder %s26, 1
      %p174 = por %p172, %p173
      %p176 = scmp.ne.s32.totalorder %s159, %s175
      %p177 = scmp.eq.s32.totalorder %s26, 0
      %p178 = por %p176, %p177
      %p179 = scmp.le.s32.totalorder 1, %s20
      %p180 = scmp.lt.s32.totalorder %s20, 3
      %p181 = pnand %p179, %p180
      %p182 = pneg %p181
      // Predicated region
      $region9: #{tpu_custom_call.1} parent=5 // pred_check
        _
      $region10: #{tpu_custom_call.1} parent=5 // pred_check_branch
        %184 = sbr.rel (%p181) target = $region12
      $region11: #{tpu_custom_call.1} parent=5 // pred_region
        %s185 = ssub.s32 %s20, 1
        // Predicated region
        $region13: #{tpu_custom_call.1} parent=11 // pred_check
          %p186 = pneg %p41
        $region14: #{tpu_custom_call.1} parent=11 // pred_check_branch
          %188 = sbr.rel (%p186) target = $region16
        $region15: #{tpu_custom_call.1} parent=11 // pred_region
          _
        $region16: #{tpu_custom_call.1} parent=11 // pred_fallthru
          _
      $region12: #{tpu_custom_call.1} parent=5 // pred_fallthru
        _
      %p189 = scmp.lt.s32.totalorder %s20, 2
      // Predicated region
      $region17: #{tpu_custom_call.1} parent=5 // pred_check
        %p190 = pneg %p189
      $region18: #{tpu_custom_call.1} parent=5 // pred_check_branch
        %192 = sbr.rel (%p190) target = $region20
      $region19: #{tpu_custom_call.1} parent=5 // pred_region
        // Predicated region
        $region21: #{tpu_custom_call.1} parent=19 // pred_check
          %p193 = pneg %p61
        $region22: #{tpu_custom_call.1} parent=19 // pred_check_branch
          %195 = sbr.rel (%p193) target = $region24
        $region23: #{tpu_custom_call.1} parent=19 // pred_region
          %p196 = scmp.lt.s32.totalorder %s20, 1
          %s197 = scalar_select %p196, %s20, 1
          %s198 = smul.addr %s197, 2
          %s199 = smul.addr %s198, 8
          %s200 = scalar_lea.vmem %s1, %s199
        $region24: #{tpu_custom_call.1} parent=19 // pred_fallthru
          _
        // Predicated region
        $region25: #{tpu_custom_call.1} parent=19 // pred_check
          %p201 = pneg %p87
        $region26: #{tpu_custom_call.1} parent=19 // pred_check_branch
          %203 = sbr.rel (%p201) target = $region28
        $region27: #{tpu_custom_call.1} parent=19 // pred_region
          %s204 = sand.u32 %s77, 1
          %s205 = scalar_lea.sflag [#allocation3], %s204
          %s206 = sand.u32 %s77, 1
          %s207 = smul.addr %s206, 64
          %s208 = scalar_lea.vmem [#allocation2], %s207
          %s210 = ssub.s32 1024, 1024
          %211 = vsyncadd %s205, %s210
          %s212 = smul.addr %s20, 8
          %s213 = smul.addr %s212, 128
          %s214 = scalar_lea.hbm %s2, %s213
          %s215 = sshll.u32 %s208, 4
          %s216 = int_to_ptr.vmem [resolvable:$true] %s215
          %221 = dma.hbm_to_vmem [thread:$0]  %s214, 1024, %s216, %s205, 128, 128, 8
        $region28: #{tpu_custom_call.1} parent=19 // pred_fallthru
          _
        // Predicated region
        $region29: #{tpu_custom_call.1} parent=19 // pred_check
          %p222 = pneg %p113
        $region30: #{tpu_custom_call.1} parent=19 // pred_check_branch
          %224 = sbr.rel (%p222) target = $region32
        $region31: #{tpu_custom_call.1} parent=19 // pred_region
          %s225 = sand.u32 %s20, 1
          %s226 = scalar_lea.sflag [#allocation6], %s225
          %s227 = sand.u32 %s103, 1
          %s228 = smul.addr %s227, 64
          %s229 = scalar_lea.vmem [#allocation5], %s228
          %s231 = ssub.s32 1024, 1024
          %232 = vsyncadd %s226, %s231
          %s233 = smul.addr %s20, 8
          %s234 = smul.addr %s233, 128
          %s235 = scalar_lea.hbm %s3, %s234
          %s236 = sshll.u32 %s229, 4
          %s237 = int_to_ptr.vmem [resolvable:$true] %s236
          %242 = dma.hbm_to_vmem [thread:$0]  %s235, 1024, %s237, %s226, 128, 128, 8
        $region32: #{tpu_custom_call.1} parent=19 // pred_fallthru
          _
        // Predicated region
        $region33: #{tpu_custom_call.1} parent=19 // pred_check
          %p243 = pneg %p139
        $region34: #{tpu_custom_call.1} parent=19 // pred_check_branch
          %245 = sbr.rel (%p243) target = $region36
        $region35: #{tpu_custom_call.1} parent=19 // pred_region
          %s246 = sand.u32 %s20, 1
          %s247 = scalar_lea.sflag [#allocation6], %s246
          %s248 = sand.u32 %s129, 1
          %s249 = smul.addr %s248, 64
          %s250 = scalar_lea.vmem [#allocation7], %s249
          %s252 = ssub.s32 1024, 1024
          %253 = vsyncadd %s247, %s252
          %s254 = smul.addr %s20, 8
          %s255 = smul.addr %s254, 128
          %s256 = scalar_lea.hbm %s4, %s255
          %s257 = sshll.u32 %s250, 4
          %s258 = int_to_ptr.vmem [resolvable:$true] %s257
          %263 = dma.hbm_to_vmem [thread:$0]  %s256, 1024, %s258, %s247, 128, 128, 8
        $region36: #{tpu_custom_call.1} parent=19 // pred_fallthru
          _
      $region20: #{tpu_custom_call.1} parent=5 // pred_fallthru
        _
      %p264 = scmp.le.s32.totalorder 1, %s20
      %p265 = scmp.lt.s32.totalorder %s20, 3
      %p266 = pnand %p264, %p265
      %p267 = pneg %p266
      // Predicated region
      $region37: #{tpu_custom_call.1} parent=5 // pred_check
        _
      $region38: #{tpu_custom_call.1} parent=5 // pred_check_branch
        %269 = sbr.rel (%p266) target = $region40
      $region39: #{tpu_custom_call.1} parent=5 // pred_region
        %s270 = ssub.s32 %s20, 1
        %s271 = sand.u32 %s80, 1
        %s272 = scalar_lea.sflag [#allocation3], %s271
        %s273 = sand.u32 %s80, 1
        %s274 = smul.addr %s273, 64
        %s275 = scalar_lea.vmem [#allocation2], %s274
        // Predicated region
        $region41: #{tpu_custom_call.1} parent=39 // pred_check
          %p276 = pneg %p93
        $region42: #{tpu_custom_call.1} parent=39 // pred_check_branch
          %278 = sbr.rel (%p276) target = $region44
        $region43: #{tpu_custom_call.1} parent=39 // pred_region
          %279 = dma.done %s272, 1024
        $region44: #{tpu_custom_call.1} parent=39 // pred_fallthru
          _
        %s280 = sand.u32 %s25, 1
        %s281 = scalar_lea.sflag [#allocation6], %s280
        %s282 = sand.u32 %s106, 1
        %s283 = smul.addr %s282, 64
        %s284 = scalar_lea.vmem [#allocation5], %s283
        // Predicated region
        $region45: #{tpu_custom_call.1} parent=39 // pred_check
          %p285 = pneg %p119
        $region46: #{tpu_custom_call.1} parent=39 // pred_check_branch
          %287 = sbr.rel (%p285) target = $region48
        $region47: #{tpu_custom_call.1} parent=39 // pred_region
          %288 = dma.done %s281, 1024
        $region48: #{tpu_custom_call.1} parent=39 // pred_fallthru
          _
        %s289 = sand.u32 %s25, 1
        %s290 = scalar_lea.sflag [#allocation6], %s289
        %s291 = sand.u32 %s132, 1
        %s292 = smul.addr %s291, 64
        %s293 = scalar_lea.vmem [#allocation7], %s292
        // Predicated region
        $region49: #{tpu_custom_call.1} parent=39 // pred_check
          %p294 = pneg %p145
        $region50: #{tpu_custom_call.1} parent=39 // pred_check_branch
          %296 = sbr.rel (%p294) target = $region52
        $region51: #{tpu_custom_call.1} parent=39 // pred_region
          %297 = dma.done %s290, 1024
        $region52: #{tpu_custom_call.1} parent=39 // pred_fallthru
          _
        %p298 = pneg %p41
        %p299 = pneg %p38
        %p300 = scmp.lt.s32.totalorder %s25, 1
        %s301 = scalar_select %p300, %s25, 1
        %s302 = smul.addr %s301, 2
        %s303 = smul.addr %s302, 8
        %s304 = scalar_lea.vmem %s1, %s303
        %p305 = pneg %p67
        %p306 = pneg %p64
        %s307 = sand.u32 %s80, 1
        %s308 = scalar_lea.sflag [#allocation3], %s307
        %s309 = sand.u32 %s80, 1
        %s310 = smul.addr %s309, 64
        %s311 = scalar_lea.vmem [#allocation2], %s310
        %p312 = pneg %p93
        %p313 = pneg %p90
        %s314 = sand.u32 %s25, 1
        %s315 = scalar_lea.sflag [#allocation6], %s314
        %s316 = sand.u32 %s106, 1
        %s317 = smul.addr %s316, 64
        %s318 = scalar_lea.vmem [#allocation5], %s317
        %p319 = pneg %p119
        %p320 = pneg %p116
        %s321 = sand.u32 %s25, 1
        %s322 = scalar_lea.sflag [#allocation6], %s321
        %s323 = sand.u32 %s132, 1
        %s324 = smul.addr %s323, 64
        %s325 = scalar_lea.vmem [#allocation7], %s324
        %p326 = pneg %p145
        %p327 = pneg %p142
        %p328 = pneg %p171
        %p329 = pneg %p168
        %s330 = sand.u32 %s158, 1
        %s331 = scalar_lea.sflag [#allocation4], %s330
        %s332 = sand.u32 %s158, 1
        %s333 = smul.addr %s332, 16
        %s334 = scalar_lea.vmem [#allocation8], %s333
        %p335 = scmp.lt.s32.totalorder %s25, 1
        %s336 = scalar_select %p335, %s25, 1
        %s337 = smul.addr %s336, 2
        %s338 = smul.addr %s337, 8
        %s339 = scalar_lea.vmem %s1, %s338
        %v341 = vld [vmem:[%s339] sm:$0xff]
        %v342 = vld [vmem:[%s339 + $0x8] sm:$0xff]
        %v343 = vld [vmem:[%s0] sm:$0xff]
        %v344 = vpack.c.bf16 %v343, %v343
        %v345 = vld [vmem:[%s284] sm:$0xff]
        %v346 = vld [vmem:[%s284 + $0x8] sm:$0xff]
        %348 = vset.pattern.permute.xlu0 0
        %349 = vperm.xlu0 %348, %v341
        %v350 = vpop.permute.xlu0 %349
        %353 = vset.pattern.permute.xlu0 0
        %354 = vperm.xlu0 %353, %v342
        %v355 = vpop.permute.xlu0 %354
        %v357 = vmul.f32 %v345, %v350
        %v358 = vmul.f32 %v346, %v355
        %v359 = vpack.c.bf16 %v358, %v357
        %v360 = vld [vmem:[%s293] sm:$0xff]
        %v361 = vld [vmem:[%s293 + $0x8] sm:$0xff]
        %v362 = vmul.f32 %v360, %v350
        %v363 = vmul.f32 %v361, %v355
        %v364 = vpack.c.bf16 %v363, %v362
        %vm365 = vcmask 130048
        %v367 = vsel %vm365, %v344, 0
        %369 = vmatprep.subr.bf16.mxu0 0
        %370 = vmatpush1.bf16.msra.mxu0 %v359
        %371 = vmatprep.subr.bf16.mxu0 0
        %372 = vmatpush1.bf16.msra.mxu0 0
        %373 = vmatprep.subr.bf16.mxu0 0
        %374 = vmatpush1.bf16.msra.mxu0 0
        %375 = vmatprep.subr.bf16.mxu0 0
        %376 = vmatpush1.bf16.msra.mxu0 0
        %377 = vmatprep.subr.bf16.mxu0 0
        %378 = vmatpush1.bf16.msra.mxu0 0
        %379 = vmatprep.subr.bf16.mxu0 0
        %380 = vmatpush1.bf16.msra.mxu0 0
        %381 = vmatprep.subr.bf16.mxu0 0
        %382 = vmatpush1.bf16.msra.mxu0 0
        %383 = vmatprep.subr.bf16.mxu0 0
        %384 = vmatpush1.bf16.msra.mxu0 0
        %385 = vmatprep.subr.bf16.mxu0 0
        %386 = vmatpush1.bf16.msra.mxu0 0
        %387 = vmatprep.subr.bf16.mxu0 0
        %388 = vmatpush1.bf16.msra.mxu0 0
        %389 = vmatprep.subr.bf16.mxu0 0
        %390 = vmatpush1.bf16.msra.mxu0 0
        %391 = vmatprep.subr.bf16.mxu0 0
        %392 = vmatpush1.bf16.msra.mxu0 0
        %393 = vmatprep.subr.bf16.mxu0 0
        %394 = vmatpush1.bf16.msra.mxu0 0
        %395 = vmatprep.subr.bf16.mxu0 0
        %396 = vmatpush1.bf16.msra.mxu0 0
        %397 = vmatprep.subr.bf16.mxu0 0
        %398 = vmatpush1.bf16.msra.mxu0 0
        %399 = vmatprep.subr.bf16.mxu0 0
        %400 = vmatpush1.bf16.msra.mxu0 0
        %401 = vmatprep.mubr.bf16.mxu0 0
        %402 = vmatmul.mubr.bf16.gmra.mrb[0].mxu0 %v367
        %v403 = vpop.f32.mrb[0].mxu0
        %v404 = vadd.f32 0.0, %v403
        %v405 = vpop.f32.mrb[0].mxu0
        %v406 = vpop.f32.mrb[0].mxu0
        %v407 = vpop.f32.mrb[0].mxu0
        %408 = vdwg.mxu0
        %409 = vmatprep.subr.bf16.mxu0 0
        %410 = vmatpush1.bf16.msra.mxu0 %v364
        %411 = vmatprep.subr.bf16.mxu0 0
        %412 = vmatpush1.bf16.msra.mxu0 0
        %413 = vmatprep.subr.bf16.mxu0 0
        %414 = vmatpush1.bf16.msra.mxu0 0
        %415 = vmatprep.subr.bf16.mxu0 0
        %416 = vmatpush1.bf16.msra.mxu0 0
        %417 = vmatprep.subr.bf16.mxu0 0
        %418 = vmatpush1.bf16.msra.mxu0 0
        %419 = vmatprep.subr.bf16.mxu0 0
        %420 = vmatpush1.bf16.msra.mxu0 0
        %421 = vmatprep.subr.bf16.mxu0 0
        %422 = vmatpush1.bf16.msra.mxu0 0
        %423 = vmatprep.subr.bf16.mxu0 0
        %424 = vmatpush1.bf16.msra.mxu0 0
        %425 = vmatprep.subr.bf16.mxu0 0
        %426 = vmatpush1.bf16.msra.mxu0 0
        %427 = vmatprep.subr.bf16.mxu0 0
        %428 = vmatpush1.bf16.msra.mxu0 0
        %429 = vmatprep.subr.bf16.mxu0 0
        %430 = vmatpush1.bf16.msra.mxu0 0
        %431 = vmatprep.subr.bf16.mxu0 0
        %432 = vmatpush1.bf16.msra.mxu0 0
        %433 = vmatprep.subr.bf16.mxu0 0
        %434 = vmatpush1.bf16.msra.mxu0 0
        %435 = vmatprep.subr.bf16.mxu0 0
        %436 = vmatpush1.bf16.msra.mxu0 0
        %437 = vmatprep.subr.bf16.mxu0 0
        %438 = vmatpush1.bf16.msra.mxu0 0
        %439 = vmatprep.subr.bf16.mxu0 0
        %440 = vmatpush1.bf16.msra.mxu0 0
        %441 = vmatprep.mubr.bf16.mxu0 0
        %442 = vmatmul.mubr.bf16.gmra.mrb[0].mxu0 %v367
        %v443 = vpop.f32.mrb[0].mxu0
        %v444 = vadd.f32 0.0, %v443
        %v445 = vpop.f32.mrb[0].mxu0
        %v446 = vpop.f32.mrb[0].mxu0
        %v447 = vpop.f32.mrb[0].mxu0
        %448 = vdwg.mxu0
        %v449 = vld [vmem:[%s275] sm:$0xff]
        %v450 = vld [vmem:[%s275 + $0x8] sm:$0xff]
        %v451 = vpack.c.bf16 %v450, %v449
        %v452 = vpack.c.bf16 %v404, %v404
        %vm453 = vcmask 261120
        %v455 = vsel %vm453, %v451, 0
        %v458 = vsel %vm453, %v452, 0
        %460 = vmatprep.subr.bf16.mxu0 0
        %461 = vmatpush1.bf16.xpose.msra.mxu0 %v458
        %462 = vmatprep.subr.bf16.mxu0 0
        %463 = vmatpush1.bf16.xpose.msra.mxu0 0
        %464 = vmatprep.subr.bf16.mxu0 0
        %465 = vmatpush1.bf16.xpose.msra.mxu0 0
        %466 = vmatprep.subr.bf16.mxu0 0
        %467 = vmatpush1.bf16.xpose.msra.mxu0 0
        %468 = vmatprep.subr.bf16.mxu0 0
        %469 = vmatpush1.bf16.xpose.msra.mxu0 0
        %470 = vmatprep.subr.bf16.mxu0 0
        %471 = vmatpush1.bf16.xpose.msra.mxu0 0
        %472 = vmatprep.subr.bf16.mxu0 0
        %473 = vmatpush1.bf16.xpose.msra.mxu0 0
        %474 = vmatprep.subr.bf16.mxu0 0
        %475 = vmatpush1.bf16.xpose.msra.mxu0 0
        %476 = vmatprep.subr.bf16.mxu0 0
        %477 = vmatpush1.bf16.xpose.msra.mxu0 0
        %478 = vmatprep.subr.bf16.mxu0 0
        %479 = vmatpush1.bf16.xpose.msra.mxu0 0
        %480 = vmatprep.subr.bf16.mxu0 0
        %481 = vmatpush1.bf16.xpose.msra.mxu0 0
        %482 = vmatprep.subr.bf16.mxu0 0
        %483 = vmatpush1.bf16.xpose.msra.mxu0 0
        %484 = vmatprep.subr.bf16.mxu0 0
        %485 = vmatpush1.bf16.xpose.msra.mxu0 0
        %486 = vmatprep.subr.bf16.mxu0 0
        %487 = vmatpush1.bf16.xpose.msra.mxu0 0
        %488 = vmatprep.subr.bf16.mxu0 0
        %489 = vmatpush1.bf16.xpose.msra.mxu0 0
        %490 = vmatprep.subr.bf16.mxu0 0
        %491 = vmatpush1.bf16.xpose.msra.mxu0 0
        %492 = vmatprep.mubr.bf16.mxu0 0
        %493 = vmatmul.mubr.bf16.gmra.mrb[0].mxu0 %v455
        %v494 = vpop.f32.mrb[0].mxu0
        %v495 = vadd.f32 0.0, %v494
        %v496 = vpop.f32.mrb[0].mxu0
        %v497 = vpop.f32.mrb[0].mxu0
        %v498 = vadd.f32 0.0, %v497
        %v499 = vpop.f32.mrb[0].mxu0
        %500 = vdwg.mxu0
        %v501 = vmul.f32 %v495, 0.17677669
        %v502 = vmul.f32 %v498, 0.17677669
        %vm503 = vcmask 64512
        %v504 = vsel %vm503, %v501, -inf
        %505 = vmax.xlane.f32.xlu0 %v504
        %v506 = vpop.xlane.xlu0 %505
        %v507 = vsel %vm503, %v502, -inf
        %508 = vmax.xlane.f32.xlu0 %v507
        %v509 = vpop.xlane.xlu0 %508
        %v510 = vsub.f32 %v501, %v506
        %v511 = vsub.f32 %v502, %v509
        %v512 = vmul.f32 %v510, 1.442695
        %v513 = vpow.pop %v512
        %v514 = vmul.f32 %v511, 1.442695
        %v515 = vpow.pop %v514
        %v516 = vsel %vm503, %v513, 0.0
        %517 = vadd.xlane.f32.xlu0 %v516
        %v518 = vpop.xlane.xlu0 %517
        %v519 = vsel %vm503, %v515, 0.0
        %520 = vadd.xlane.f32.xlu0 %v519
        %v521 = vpop.xlane.xlu0 %520
        %v522 = vrcp.pop %v518
        %v523 = vrcp.pop %v521
        %v524 = vmul.f32 %v513, %v522
        %v525 = vmul.f32 %v515, %v523
        %v526 = vpack.c.bf16 %v525, %v524
        %v527 = vpack.c.bf16 %v444, %v444
        %v529 = vsel %vm503, %v526, 0
        %vm531 = vcmask 1043456
        %v533 = vsel %vm531, %v527, 0
        %535 = vmatprep.subr.bf16.mxu0 0
        %536 = vmatpush1.bf16.msra.mxu0 %v533
        %537 = vmatprep.subr.bf16.mxu0 0
        %538 = vmatpush1.bf16.msra.mxu0 0
        %539 = vmatprep.subr.bf16.mxu0 0
        %540 = vmatpush1.bf16.msra.mxu0 0
        %541 = vmatprep.subr.bf16.mxu0 0
        %542 = vmatpush1.bf16.msra.mxu0 0
        %543 = vmatprep.subr.bf16.mxu0 0
        %544 = vmatpush1.bf16.msra.mxu0 0
        %545 = vmatprep.subr.bf16.mxu0 0
        %546 = vmatpush1.bf16.msra.mxu0 0
        %547 = vmatprep.subr.bf16.mxu0 0
        %548 = vmatpush1.bf16.msra.mxu0 0
        %549 = vmatprep.subr.bf16.mxu0 0
        %550 = vmatpush1.bf16.msra.mxu0 0
        %551 = vmatprep.subr.bf16.mxu0 0
        %552 = vmatpush1.bf16.msra.mxu0 0
        %553 = vmatprep.subr.bf16.mxu0 0
        %554 = vmatpush1.bf16.msra.mxu0 0
        %555 = vmatprep.subr.bf16.mxu0 0
        %556 = vmatpush1.bf16.msra.mxu0 0
        %557 = vmatprep.subr.bf16.mxu0 0
        %558 = vmatpush1.bf16.msra.mxu0 0
        %559 = vmatprep.subr.bf16.mxu0 0
        %560 = vmatpush1.bf16.msra.mxu0 0
        %561 = vmatprep.subr.bf16.mxu0 0
        %562 = vmatpush1.bf16.msra.mxu0 0
        %563 = vmatprep.subr.bf16.mxu0 0
        %564 = vmatpush1.bf16.msra.mxu0 0
        %565 = vmatprep.subr.bf16.mxu0 0
        %566 = vmatpush1.bf16.msra.mxu0 0
        %567 = vmatprep.mubr.bf16.mxu0 0
        %568 = vmatmul.mubr.bf16.gmra.mrb[0].mxu0 %v529
        %v569 = vpop.f32.mrb[0].mxu0
        %v570 = vadd.f32 0.0, %v569
        %v571 = vpop.f32.mrb[0].mxu0
        %v572 = vpop.f32.mrb[0].mxu0
        %v573 = vadd.f32 0.0, %v572
        %v574 = vpop.f32.mrb[0].mxu0
        %575 = vdwg.mxu0
        %s576 = scalar_lea.vmem %s0, 8
        %v577 = vld [vmem:[%s576] sm:$0xff]
        %v578 = vpack.c.bf16 %v577, %v577
        %s579 = scalar_lea.vmem %s284, 16 [#allocation5]
        %v580 = vld [vmem:[%s579] sm:$0xff]
        %v581 = vld [vmem:[%s579 + $0x8] sm:$0xff]
        %v582 = vmul.f32 %v580, %v350
        %v583 = vmul.f32 %v581, %v355
        %v584 = vpack.c.bf16 %v583, %v582
        %s585 = scalar_lea.vmem %s293, 16 [#allocation7]
        %v586 = vld [vmem:[%s585] sm:$0xff]
        %v587 = vld [vmem:[%s585 + $0x8] sm:$0xff]
        %v588 = vmul.f32 %v586, %v350
        %v589 = vmul.f32 %v587, %v355
        %v590 = vpack.c.bf16 %v589, %v588
        %v592 = vsel %vm365, %v578, 0
        %594 = vmatprep.subr.bf16.mxu0 0
        %595 = vmatpush1.bf16.msra.mxu0 %v584
        %596 = vmatprep.subr.bf16.mxu0 0
        %597 = vmatpush1.bf16.msra.mxu0 0
        %598 = vmatprep.subr.bf16.mxu0 0
        %599 = vmatpush1.bf16.msra.mxu0 0
        %600 = vmatprep.subr.bf16.mxu0 0
        %601 = vmatpush1.bf16.msra.mxu0 0
        %602 = vmatprep.subr.bf16.mxu0 0
        %603 = vmatpush1.bf16.msra.mxu0 0
        %604 = vmatprep.subr.bf16.mxu0 0
        %605 = vmatpush1.bf16.msra.mxu0 0
        %606 = vmatprep.subr.bf16.mxu0 0
        %607 = vmatpush1.bf16.msra.mxu0 0
        %608 = vmatprep.subr.bf16.mxu0 0
        %609 = vmatpush1.bf16.msra.mxu0 0
        %610 = vmatprep.subr.bf16.mxu0 0
        %611 = vmatpush1.bf16.msra.mxu0 0
        %612 = vmatprep.subr.bf16.mxu0 0
        %613 = vmatpush1.bf16.msra.mxu0 0
        %614 = vmatprep.subr.bf16.mxu0 0
        %615 = vmatpush1.bf16.msra.mxu0 0
        %616 = vmatprep.subr.bf16.mxu0 0
        %617 = vmatpush1.bf16.msra.mxu0 0
        %618 = vmatprep.subr.bf16.mxu0 0
        %619 = vmatpush1.bf16.msra.mxu0 0
        %620 = vmatprep.subr.bf16.mxu0 0
        %621 = vmatpush1.bf16.msra.mxu0 0
        %622 = vmatprep.subr.bf16.mxu0 0
        %623 = vmatpush1.bf16.msra.mxu0 0
        %624 = vmatprep.subr.bf16.mxu0 0
        %625 = vmatpush1.bf16.msra.mxu0 0
        %626 = vmatprep.mubr.bf16.mxu0 0
        %627 = vmatmul.mubr.bf16.gmra.mrb[0].mxu0 %v592
        %v628 = vpop.f32.mrb[0].mxu0
        %v629 = vadd.f32 0.0, %v628
        %v630 = vpop.f32.mrb[0].mxu0
        %v631 = vpop.f32.mrb[0].mxu0
        %v632 = vpop.f32.mrb[0].mxu0
        %633 = vdwg.mxu0
        %634 = vmatprep.subr.bf16.mxu0 0
        %635 = vmatpush1.bf16.msra.mxu0 %v590
        %636 = vmatprep.subr.bf16.mxu0 0
        %637 = vmatpush1.bf16.msra.mxu0 0
        %638 = vmatprep.subr.bf16.mxu0 0
        %639 = vmatpush1.bf16.msra.mxu0 0
        %640 = vmatprep.subr.bf16.mxu0 0
        %641 = vmatpush1.bf16.msra.mxu0 0
        %642 = vmatprep.subr.bf16.mxu0 0
        %643 = vmatpush1.bf16.msra.mxu0 0
        %644 = vmatprep.subr.bf16.mxu0 0
        %645 = vmatpush1.bf16.msra.mxu0 0
        %646 = vmatprep.subr.bf16.mxu0 0
        %647 = vmatpush1.bf16.msra.mxu0 0
        %648 = vmatprep.subr.bf16.mxu0 0
        %649 = vmatpush1.bf16.msra.mxu0 0
        %650 = vmatprep.subr.bf16.mxu0 0
        %651 = vmatpush1.bf16.msra.mxu0 0
        %652 = vmatprep.subr.bf16.mxu0 0
        %653 = vmatpush1.bf16.msra.mxu0 0
        %654 = vmatprep.subr.bf16.mxu0 0
        %655 = vmatpush1.bf16.msra.mxu0 0
        %656 = vmatprep.subr.bf16.mxu0 0
        %657 = vmatpush1.bf16.msra.mxu0 0
        %658 = vmatprep.subr.bf16.mxu0 0
        %659 = vmatpush1.bf16.msra.mxu0 0
        %660 = vmatprep.subr.bf16.mxu0 0
        %661 = vmatpush1.bf16.msra.mxu0 0
        %662 = vmatprep.subr.bf16.mxu0 0
        %663 = vmatpush1.bf16.msra.mxu0 0
        %664 = vmatprep.subr.bf16.mxu0 0
        %665 = vmatpush1.bf16.msra.mxu0 0
        %666 = vmatprep.mubr.bf16.mxu0 0
        %667 = vmatmul.mubr.bf16.gmra.mrb[0].mxu0 %v592
        %v668 = vpop.f32.mrb[0].mxu0
        %v669 = vadd.f32 0.0, %v668
        %v670 = vpop.f32.mrb[0].mxu0
        %v671 = vpop.f32.mrb[0].mxu0
        %v672 = vpop.f32.mrb[0].mxu0
        %673 = vdwg.mxu0
        %s674 = scalar_lea.vmem %s275, 16 [#allocation2]
        %v675 = vld [vmem:[%s674] sm:$0xff]
        %v676 = vld [vmem:[%s674 + $0x8] sm:$0xff]
        %v677 = vpack.c.bf16 %v676, %v675
        %v678 = vpack.c.bf16 %v629, %v629
        %v680 = vsel %vm453, %v677, 0
        %v683 = vsel %vm453, %v678, 0
        %685 = vmatprep.subr.bf16.mxu0 0
        %686 = vmatpush1.bf16.xpose.msra.mxu0 %v683
        %687 = vmatprep.subr.bf16.mxu0 0
        %688 = vmatpush1.bf16.xpose.msra.mxu0 0
        %689 = vmatprep.subr.bf16.mxu0 0
        %690 = vmatpush1.bf16.xpose.msra.mxu0 0
        %691 = vmatprep.subr.bf16.mxu0 0
        %692 = vmatpush1.bf16.xpose.msra.mxu0 0
        %693 = vmatprep.subr.bf16.mxu0 0
        %694 = vmatpush1.bf16.xpose.msra.mxu0 0
        %695 = vmatprep.subr.bf16.mxu0 0
        %696 = vmatpush1.bf16.xpose.msra.mxu0 0
        %697 = vmatprep.subr.bf16.mxu0 0
        %698 = vmatpush1.bf16.xpose.msra.mxu0 0
        %699 = vmatprep.subr.bf16.mxu0 0
        %700 = vmatpush1.bf16.xpose.msra.mxu0 0
        %701 = vmatprep.subr.bf16.mxu0 0
        %702 = vmatpush1.bf16.xpose.msra.mxu0 0
        %703 = vmatprep.subr.bf16.mxu0 0
        %704 = vmatpush1.bf16.xpose.msra.mxu0 0
        %705 = vmatprep.subr.bf16.mxu0 0
        %706 = vmatpush1.bf16.xpose.msra.mxu0 0
        %707 = vmatprep.subr.bf16.mxu0 0
        %708 = vmatpush1.bf16.xpose.msra.mxu0 0
        %709 = vmatprep.subr.bf16.mxu0 0
        %710 = vmatpush1.bf16.xpose.msra.mxu0 0
        %711 = vmatprep.subr.bf16.mxu0 0
        %712 = vmatpush1.bf16.xpose.msra.mxu0 0
        %713 = vmatprep.subr.bf16.mxu0 0
        %714 = vmatpush1.bf16.xpose.msra.mxu0 0
        %715 = vmatprep.subr.bf16.mxu0 0
        %716 = vmatpush1.bf16.xpose.msra.mxu0 0
        %717 = vmatprep.mubr.bf16.mxu0 0
        %718 = vmatmul.mubr.bf16.gmra.mrb[0].mxu0 %v680
        %v719 = vpop.f32.mrb[0].mxu0
        %v720 = vadd.f32 0.0, %v719
        %v721 = vpop.f32.mrb[0].mxu0
        %v722 = vpop.f32.mrb[0].mxu0
        %v723 = vadd.f32 0.0, %v722
        %v724 = vpop.f32.mrb[0].mxu0
        %725 = vdwg.mxu0
        %v726 = vmul.f32 %v720, 0.17677669
        %v727 = vmul.f32 %v723, 0.17677669
        %v728 = vsel %vm503, %v726, -inf
        %729 = vmax.xlane.f32.xlu0 %v728
        %v730 = vpop.xlane.xlu0 %729
        %v731 = vsel %vm503, %v727, -inf
        %732 = vmax.xlane.f32.xlu0 %v731
        %v733 = vpop.xlane.xlu0 %732
        %v734 = vsub.f32 %v726, %v730
        %v735 = vsub.f32 %v727, %v733
        %v736 = vmul.f32 %v734, 1.442695
        %v737 = vpow.pop %v736
        %v738 = vmul.f32 %v735, 1.442695
        %v739 = vpow.pop %v738
        %v740 = vsel %vm503, %v737, 0.0
        %741 = vadd.xlane.f32.xlu0 %v740
        %v742 = vpop.xlane.xlu0 %741
        %v743 = vsel %vm503, %v739, 0.0
        %744 = vadd.xlane.f32.xlu0 %v743
        %v745 = vpop.xlane.xlu0 %744
        %v746 = vrcp.pop %v742
        %v747 = vrcp.pop %v745
        %v748 = vmul.f32 %v737, %v746
        %v749 = vmul.f32 %v739, %v747
        %v750 = vpack.c.bf16 %v749, %v748
        %v751 = vpack.c.bf16 %v669, %v669
        %v753 = vsel %vm503, %v750, 0
        %v756 = vsel %vm531, %v751, 0
        %758 = vmatprep.subr.bf16.mxu0 0
        %759 = vmatpush1.bf16.msra.mxu0 %v756
        %760 = vmatprep.subr.bf16.mxu0 0
        %761 = vmatpush1.bf16.msra.mxu0 0
        %762 = vmatprep.subr.bf16.mxu0 0
        %763 = vmatpush1.bf16.msra.mxu0 0
        %764 = vmatprep.subr.bf16.mxu0 0
        %765 = vmatpush1.bf16.msra.mxu0 0
        %766 = vmatprep.subr.bf16.mxu0 0
        %767 = vmatpush1.bf16.msra.mxu0 0
        %768 = vmatprep.subr.bf16.mxu0 0
        %769 = vmatpush1.bf16.msra.mxu0 0
        %770 = vmatprep.subr.bf16.mxu0 0
        %771 = vmatpush1.bf16.msra.mxu0 0
        %772 = vmatprep.subr.bf16.mxu0 0
        %773 = vmatpush1.bf16.msra.mxu0 0
        %774 = vmatprep.subr.bf16.mxu0 0
        %775 = vmatpush1.bf16.msra.mxu0 0
        %776 = vmatprep.subr.bf16.mxu0 0
        %777 = vmatpush1.bf16.msra.mxu0 0
        %778 = vmatprep.subr.bf16.mxu0 0
        %779 = vmatpush1.bf16.msra.mxu0 0
        %780 = vmatprep.subr.bf16.mxu0 0
        %781 = vmatpush1.bf16.msra.mxu0 0
        %782 = vmatprep.subr.bf16.mxu0 0
        %783 = vmatpush1.bf16.msra.mxu0 0
        %784 = vmatprep.subr.bf16.mxu0 0
        %785 = vmatpush1.bf16.msra.mxu0 0
        %786 = vmatprep.subr.bf16.mxu0 0
        %787 = vmatpush1.bf16.msra.mxu0 0
        %788 = vmatprep.subr.bf16.mxu0 0
        %789 = vmatpush1.bf16.msra.mxu0 0
        %790 = vmatprep.mubr.bf16.mxu0 0
        %791 = vmatmul.mubr.bf16.gmra.mrb[0].mxu0 %v753
        %v792 = vpop.f32.mrb[0].mxu0
        %v793 = vadd.f32 0.0, %v792
        %v794 = vpop.f32.mrb[0].mxu0
        %v795 = vpop.f32.mrb[0].mxu0
        %v796 = vadd.f32 0.0, %v795
        %v797 = vpop.f32.mrb[0].mxu0
        %798 = vdwg.mxu0
        %s799 = scalar_lea.vmem %s0, 16
        %v800 = vld [vmem:[%s799] sm:$0xff]
        %v801 = vpack.c.bf16 %v800, %v800
        %s802 = scalar_lea.vmem %s284, 32 [#allocation5]
        %v803 = vld [vmem:[%s802] sm:$0xff]
        %v804 = vld [vmem:[%s802 + $0x8] sm:$0xff]
        %v805 = vmul.f32 %v803, %v350
        %v806 = vmul.f32 %v804, %v355
        %v807 = vpack.c.bf16 %v806, %v805
        %s808 = scalar_lea.vmem %s293, 32 [#allocation7]
        %v809 = vld [vmem:[%s808] sm:$0xff]
        %v810 = vld [vmem:[%s808 + $0x8] sm:$0xff]
        %v811 = vmul.f32 %v809, %v350
        %v812 = vmul.f32 %v810, %v355
        %v813 = vpack.c.bf16 %v812, %v811
        %v815 = vsel %vm365, %v801, 0
        %817 = vmatprep.subr.bf16.mxu0 0
        %818 = vmatpush1.bf16.msra.mxu0 %v807
        %819 = vmatprep.subr.bf16.mxu0 0
        %820 = vmatpush1.bf16.msra.mxu0 0
        %821 = vmatprep.subr.bf16.mxu0 0
        %822 = vmatpush1.bf16.msra.mxu0 0
        %823 = vmatprep.subr.bf16.mxu0 0
        %824 = vmatpush1.bf16.msra.mxu0 0
        %825 = vmatprep.subr.bf16.mxu0 0
        %826 = vmatpush1.bf16.msra.mxu0 0
        %827 = vmatprep.subr.bf16.mxu0 0
        %828 = vmatpush1.bf16.msra.mxu0 0
        %829 = vmatprep.subr.bf16.mxu0 0
        %830 = vmatpush1.bf16.msra.mxu0 0
        %831 = vmatprep.subr.bf16.mxu0 0
        %832 = vmatpush1.bf16.msra.mxu0 0
        %833 = vmatprep.subr.bf16.mxu0 0
        %834 = vmatpush1.bf16.msra.mxu0 0
        %835 = vmatprep.subr.bf16.mxu0 0
        %836 = vmatpush1.bf16.msra.mxu0 0
        %837 = vmatprep.subr.bf16.mxu0 0
        %838 = vmatpush1.bf16.msra.mxu0 0
        %839 = vmatprep.subr.bf16.mxu0 0
        %840 = vmatpush1.bf16.msra.mxu0 0
        %841 = vmatprep.subr.bf16.mxu0 0
        %842 = vmatpush1.bf16.msra.mxu0 0
        %843 = vmatprep.subr.bf16.mxu0 0
        %844 = vmatpush1.bf16.msra.mxu0 0
        %845 = vmatprep.subr.bf16.mxu0 0
        %846 = vmatpush1.bf16.msra.mxu0 0
        %847 = vmatprep.subr.bf16.mxu0 0
        %848 = vmatpush1.bf16.msra.mxu0 0
        %849 = vmatprep.mubr.bf16.mxu0 0
        %850 = vmatmul.mubr.bf16.gmra.mrb[0].mxu0 %v815
        %v851 = vpop.f32.mrb[0].mxu0
        %v852 = vadd.f32 0.0, %v851
        %v853 = vpop.f32.mrb[0].mxu0
        %v854 = vpop.f32.mrb[0].mxu0
        %v855 = vpop.f32.mrb[0].mxu0
        %856 = vdwg.mxu0
        %857 = vmatprep.subr.bf16.mxu0 0
        %858 = vmatpush1.bf16.msra.mxu0 %v813
        %859 = vmatprep.subr.bf16.mxu0 0
        %860 = vmatpush1.bf16.msra.mxu0 0
        %861 = vmatprep.subr.bf16.mxu0 0
        %862 = vmatpush1.bf16.msra.mxu0 0
        %863 = vmatprep.subr.bf16.mxu0 0
        %864 = vmatpush1.bf16.msra.mxu0 0
        %865 = vmatprep.subr.bf16.mxu0 0
        %866 = vmatpush1.bf16.msra.mxu0 0
        %867 = vmatprep.subr.bf16.mxu0 0
        %868 = vmatpush1.bf16.msra.mxu0 0
        %869 = vmatprep.subr.bf16.mxu0 0
        %870 = vmatpush1.bf16.msra.mxu0 0
        %871 = vmatprep.subr.bf16.mxu0 0
        %872 = vmatpush1.bf16.msra.mxu0 0
        %873 = vmatprep.subr.bf16.mxu0 0
        %874 = vmatpush1.bf16.msra.mxu0 0
        %875 = vmatprep.subr.bf16.mxu0 0
        %876 = vmatpush1.bf16.msra.mxu0 0
        %877 = vmatprep.subr.bf16.mxu0 0
        %878 = vmatpush1.bf16.msra.mxu0 0
        %879 = vmatprep.subr.bf16.mxu0 0
        %880 = vmatpush1.bf16.msra.mxu0 0
        %881 = vmatprep.subr.bf16.mxu0 0
        %882 = vmatpush1.bf16.msra.mxu0 0
        %883 = vmatprep.subr.bf16.mxu0 0
        %884 = vmatpush1.bf16.msra.mxu0 0
        %885 = vmatprep.subr.bf16.mxu0 0
        %886 = vmatpush1.bf16.msra.mxu0 0
        %887 = vmatprep.subr.bf16.mxu0 0
        %888 = vmatpush1.bf16.msra.mxu0 0
        %889 = vmatprep.mubr.bf16.mxu0 0
        %890 = vmatmul.mubr.bf16.gmra.mrb[0].mxu0 %v815
        %v891 = vpop.f32.mrb[0].mxu0
        %v892 = vadd.f32 0.0, %v891
        %v893 = vpop.f32.mrb[0].mxu0
        %v894 = vpop.f32.mrb[0].mxu0
        %v895 = vpop.f32.mrb[0].mxu0
        %896 = vdwg.mxu0
        %s897 = scalar_lea.vmem %s275, 32 [#allocation2]
        %v898 = vld [vmem:[%s897] sm:$0xff]
        %v899 = vld [vmem:[%s897 + $0x8] sm:$0xff]
        %v900 = vpack.c.bf16 %v899, %v898
        %v901 = vpack.c.bf16 %v852, %v852
        %v903 = vsel %vm453, %v900, 0
        %v906 = vsel %vm453, %v901, 0
        %908 = vmatprep.subr.bf16.mxu0 0
        %909 = vmatpush1.bf16.xpose.msra.mxu0 %v906
        %910 = vmatprep.subr.bf16.mxu0 0
        %911 = vmatpush1.bf16.xpose.msra.mxu0 0
        %912 = vmatprep.subr.bf16.mxu0 0
        %913 = vmatpush1.bf16.xpose.msra.mxu0 0
        %914 = vmatprep.subr.bf16.mxu0 0
        %915 = vmatpush1.bf16.xpose.msra.mxu0 0
        %916 = vmatprep.subr.bf16.mxu0 0
        %917 = vmatpush1.bf16.xpose.msra.mxu0 0
        %918 = vmatprep.subr.bf16.mxu0 0
        %919 = vmatpush1.bf16.xpose.msra.mxu0 0
        %920 = vmatprep.subr.bf16.mxu0 0
        %921 = vmatpush1.bf16.xpose.msra.mxu0 0
        %922 = vmatprep.subr.bf16.mxu0 0
        %923 = vmatpush1.bf16.xpose.msra.mxu0 0
        %924 = vmatprep.subr.bf16.mxu0 0
        %925 = vmatpush1.bf16.xpose.msra.mxu0 0
        %926 = vmatprep.subr.bf16.mxu0 0
        %927 = vmatpush1.bf16.xpose.msra.mxu0 0
        %928 = vmatprep.subr.bf16.mxu0 0
        %929 = vmatpush1.bf16.xpose.msra.mxu0 0
        %930 = vmatprep.subr.bf16.mxu0 0
        %931 = vmatpush1.bf16.xpose.msra.mxu0 0
        %932 = vmatprep.subr.bf16.mxu0 0
        %933 = vmatpush1.bf16.xpose.msra.mxu0 0
        %934 = vmatprep.subr.bf16.mxu0 0
        %935 = vmatpush1.bf16.xpose.msra.mxu0 0
        %936 = vmatprep.subr.bf16.mxu0 0
        %937 = vmatpush1.bf16.xpose.msra.mxu0 0
        %938 = vmatprep.subr.bf16.mxu0 0
        %939 = vmatpush1.bf16.xpose.msra.mxu0 0
        %940 = vmatprep.mubr.bf16.mxu0 0
        %941 = vmatmul.mubr.bf16.gmra.mrb[0].mxu0 %v903
        %v942 = vpop.f32.mrb[0].mxu0
        %v943 = vadd.f32 0.0, %v942
        %v944 = vpop.f32.mrb[0].mxu0
        %v945 = vpop.f32.mrb[0].mxu0
        %v946 = vadd.f32 0.0, %v945
        %v947 = vpop.f32.mrb[0].mxu0
        %948 = vdwg.mxu0
        %v949 = vmul.f32 %v943, 0.17677669
        %v950 = vmul.f32 %v946, 0.17677669
        %v951 = vsel %vm503, %v949, -inf
        %952 = vmax.xlane.f32.xlu0 %v951
        %v953 = vpop.xlane.xlu0 %952
        %v954 = vsel %vm503, %v950, -inf
        %955 = vmax.xlane.f32.xlu0 %v954
        %v956 = vpop.xlane.xlu0 %955
        %v957 = vsub.f32 %v949, %v953
        %v958 = vsub.f32 %v950, %v956
        %v959 = vmul.f32 %v957, 1.442695
        %v960 = vpow.pop %v959
        %v961 = vmul.f32 %v958, 1.442695
        %v962 = vpow.pop %v961
        %v963 = vsel %vm503, %v960, 0.0
        %964 = vadd.xlane.f32.xlu0 %v963
        %v965 = vpop.xlane.xlu0 %964
        %v966 = vsel %vm503, %v962, 0.0
        %967 = vadd.xlane.f32.xlu0 %v966
        %v968 = vpop.xlane.xlu0 %967
        %v969 = vrcp.pop %v965
        %v970 = vrcp.pop %v968
        %v971 = vmul.f32 %v960, %v969
        %v972 = vmul.f32 %v962, %v970
        %v973 = vpack.c.bf16 %v972, %v971
        %v974 = vpack.c.bf16 %v892, %v892
        %v976 = vsel %vm503, %v973, 0
        %v979 = vsel %vm531, %v974, 0
        %981 = vmatprep.subr.bf16.mxu0 0
        %982 = vmatpush1.bf16.msra.mxu0 %v979
        %983 = vmatprep.subr.bf16.mxu0 0
        %984 = vmatpush1.bf16.msra.mxu0 0
        %985 = vmatprep.subr.bf16.mxu0 0
        %986 = vmatpush1.bf16.msra.mxu0 0
        %987 = vmatprep.subr.bf16.mxu0 0
        %988 = vmatpush1.bf16.msra.mxu0 0
        %989 = vmatprep.subr.bf16.mxu0 0
        %990 = vmatpush1.bf16.msra.mxu0 0
        %991 = vmatprep.subr.bf16.mxu0 0
        %992 = vmatpush1.bf16.msra.mxu0 0
        %993 = vmatprep.subr.bf16.mxu0 0
        %994 = vmatpush1.bf16.msra.mxu0 0
        %995 = vmatprep.subr.bf16.mxu0 0
        %996 = vmatpush1.bf16.msra.mxu0 0
        %997 = vmatprep.subr.bf16.mxu0 0
        %998 = vmatpush1.bf16.msra.mxu0 0
        %999 = vmatprep.subr.bf16.mxu0 0
        %1000 = vmatpush1.bf16.msra.mxu0 0
        %1001 = vmatprep.subr.bf16.mxu0 0
        %1002 = vmatpush1.bf16.msra.mxu0 0
        %1003 = vmatprep.subr.bf16.mxu0 0
        %1004 = vmatpush1.bf16.msra.mxu0 0
        %1005 = vmatprep.subr.bf16.mxu0 0
        %1006 = vmatpush1.bf16.msra.mxu0 0
        %1007 = vmatprep.subr.bf16.mxu0 0
        %1008 = vmatpush1.bf16.msra.mxu0 0
        %1009 = vmatprep.subr.bf16.mxu0 0
        %1010 = vmatpush1.bf16.msra.mxu0 0
        %1011 = vmatprep.subr.bf16.mxu0 0
        %1012 = vmatpush1.bf16.msra.mxu0 0
        %1013 = vmatprep.mubr.bf16.mxu0 0
        %1014 = vmatmul.mubr.bf16.gmra.mrb[0].mxu0 %v976
        %v1015 = vpop.f32.mrb[0].mxu0
        %v1016 = vadd.f32 0.0, %v1015
        %v1017 = vpop.f32.mrb[0].mxu0
        %v1018 = vpop.f32.mrb[0].mxu0
        %v1019 = vadd.f32 0.0, %v1018
        %v1020 = vpop.f32.mrb[0].mxu0
        %1021 = vdwg.mxu0
        %s1022 = scalar_lea.vmem %s0, 24
        %v1023 = vld [vmem:[%s1022] sm:$0xff]
        %v1024 = vpack.c.bf16 %v1023, %v1023
        %s1025 = scalar_lea.vmem %s284, 48 [#allocation5]
        %v1026 = vld [vmem:[%s1025] sm:$0xff]
        %v1027 = vld [vmem:[%s1025 + $0x8] sm:$0xff]
        %v1028 = vmul.f32 %v1026, %v350
        %v1029 = vmul.f32 %v1027, %v355
        %v1030 = vpack.c.bf16 %v1029, %v1028
        %s1031 = scalar_lea.vmem %s293, 48 [#allocation7]
        %v1032 = vld [vmem:[%s1031] sm:$0xff]
        %v1033 = vld [vmem:[%s1031 + $0x8] sm:$0xff]
        %v1034 = vmul.f32 %v1032, %v350
        %v1035 = vmul.f32 %v1033, %v355
        %v1036 = vpack.c.bf16 %v1035, %v1034
        %v1038 = vsel %vm365, %v1024, 0
        %1040 = vmatprep.subr.bf16.mxu0 0
        %1041 = vmatpush1.bf16.msra.mxu0 %v1030
        %1042 = vmatprep.subr.bf16.mxu0 0
        %1043 = vmatpush1.bf16.msra.mxu0 0
        %1044 = vmatprep.subr.bf16.mxu0 0
        %1045 = vmatpush1.bf16.msra.mxu0 0
        %1046 = vmatprep.subr.bf16.mxu0 0
        %1047 = vmatpush1.bf16.msra.mxu0 0
        %1048 = vmatprep.subr.bf16.mxu0 0
        %1049 = vmatpush1.bf16.msra.mxu0 0
        %1050 = vmatprep.subr.bf16.mxu0 0
        %1051 = vmatpush1.bf16.msra.mxu0 0
        %1052 = vmatprep.subr.bf16.mxu0 0
        %1053 = vmatpush1.bf16.msra.mxu0 0
        %1054 = vmatprep.subr.bf16.mxu0 0
        %1055 = vmatpush1.bf16.msra.mxu0 0
        %1056 = vmatprep.subr.bf16.mxu0 0
        %1057 = vmatpush1.bf16.msra.mxu0 0
        %1058 = vmatprep.subr.bf16.mxu0 0
        %1059 = vmatpush1.bf16.msra.mxu0 0
        %1060 = vmatprep.subr.bf16.mxu0 0
        %1061 = vmatpush1.bf16.msra.mxu0 0
        %1062 = vmatprep.subr.bf16.mxu0 0
        %1063 = vmatpush1.bf16.msra.mxu0 0
        %1064 = vmatprep.subr.bf16.mxu0 0
        %1065 = vmatpush1.bf16.msra.mxu0 0
        %1066 = vmatprep.subr.bf16.mxu0 0
        %1067 = vmatpush1.bf16.msra.mxu0 0
        %1068 = vmatprep.subr.bf16.mxu0 0
        %1069 = vmatpush1.bf16.msra.mxu0 0
        %1070 = vmatprep.subr.bf16.mxu0 0
        %1071 = vmatpush1.bf16.msra.mxu0 0
        %1072 = vmatprep.mubr.bf16.mxu0 0
        %1073 = vmatmul.mubr.bf16.gmra.mrb[0].mxu0 %v1038
        %v1074 = vpop.f32.mrb[0].mxu0
        %v1075 = vadd.f32 0.0, %v1074
        %v1076 = vpop.f32.mrb[0].mxu0
        %v1077 = vpop.f32.mrb[0].mxu0
        %v1078 = vpop.f32.mrb[0].mxu0
        %1079 = vdwg.mxu0
        %1080 = vmatprep.subr.bf16.mxu0 0
        %1081 = vmatpush1.bf16.msra.mxu0 %v1036
        %1082 = vmatprep.subr.bf16.mxu0 0
        %1083 = vmatpush1.bf16.msra.mxu0 0
        %1084 = vmatprep.subr.bf16.mxu0 0
        %1085 = vmatpush1.bf16.msra.mxu0 0
        %1086 = vmatprep.subr.bf16.mxu0 0
        %1087 = vmatpush1.bf16.msra.mxu0 0
        %1088 = vmatprep.subr.bf16.mxu0 0
        %1089 = vmatpush1.bf16.msra.mxu0 0
        %1090 = vmatprep.subr.bf16.mxu0 0
        %1091 = vmatpush1.bf16.msra.mxu0 0
        %1092 = vmatprep.subr.bf16.mxu0 0
        %1093 = vmatpush1.bf16.msra.mxu0 0
        %1094 = vmatprep.subr.bf16.mxu0 0
        %1095 = vmatpush1.bf16.msra.mxu0 0
        %1096 = vmatprep.subr.bf16.mxu0 0
        %1097 = vmatpush1.bf16.msra.mxu0 0
        %1098 = vmatprep.subr.bf16.mxu0 0
        %1099 = vmatpush1.bf16.msra.mxu0 0
        %1100 = vmatprep.subr.bf16.mxu0 0
        %1101 = vmatpush1.bf16.msra.mxu0 0
        %1102 = vmatprep.subr.bf16.mxu0 0
        %1103 = vmatpush1.bf16.msra.mxu0 0
        %1104 = vmatprep.subr.bf16.mxu0 0
        %1105 = vmatpush1.bf16.msra.mxu0 0
        %1106 = vmatprep.subr.bf16.mxu0 0
        %1107 = vmatpush1.bf16.msra.mxu0 0
        %1108 = vmatprep.subr.bf16.mxu0 0
        %1109 = vmatpush1.bf16.msra.mxu0 0
        %1110 = vmatprep.subr.bf16.mxu0 0
        %1111 = vmatpush1.bf16.msra.mxu0 0
        %1112 = vmatprep.mubr.bf16.mxu0 0
        %1113 = vmatmul.mubr.bf16.gmra.mrb[0].mxu0 %v1038
        %v1114 = vpop.f32.mrb[0].mxu0
        %v1115 = vadd.f32 0.0, %v1114
        %v1116 = vpop.f32.mrb[0].mxu0
        %v1117 = vpop.f32.mrb[0].mxu0
        %v1118 = vpop.f32.mrb[0].mxu0
        %1119 = vdwg.mxu0
        %s1120 = scalar_lea.vmem %s275, 48 [#allocation2]
        %v1121 = vld [vmem:[%s1120] sm:$0xff]
        %v1122 = vld [vmem:[%s1120 + $0x8] sm:$0xff]
        %v1123 = vpack.c.bf16 %v1122, %v1121
        %v1124 = vpack.c.bf16 %v1075, %v1075
        %v1126 = vsel %vm453, %v1123, 0
        %v1129 = vsel %vm453, %v1124, 0
        %1131 = vmatprep.subr.bf16.mxu0 0
        %1132 = vmatpush1.bf16.xpose.msra.mxu0 %v1129
        %1133 = vmatprep.subr.bf16.mxu0 0
        %1134 = vmatpush1.bf16.xpose.msra.mxu0 0
        %1135 = vmatprep.subr.bf16.mxu0 0
        %1136 = vmatpush1.bf16.xpose.msra.mxu0 0
        %1137 = vmatprep.subr.bf16.mxu0 0
        %1138 = vmatpush1.bf16.xpose.msra.mxu0 0
        %1139 = vmatprep.subr.bf16.mxu0 0
        %1140 = vmatpush1.bf16.xpose.msra.mxu0 0
        %1141 = vmatprep.subr.bf16.mxu0 0
        %1142 = vmatpush1.bf16.xpose.msra.mxu0 0
        %1143 = vmatprep.subr.bf16.mxu0 0
        %1144 = vmatpush1.bf16.xpose.msra.mxu0 0
        %1145 = vmatprep.subr.bf16.mxu0 0
        %1146 = vmatpush1.bf16.xpose.msra.mxu0 0
        %1147 = vmatprep.subr.bf16.mxu0 0
        %1148 = vmatpush1.bf16.xpose.msra.mxu0 0
        %1149 = vmatprep.subr.bf16.mxu0 0
        %1150 = vmatpush1.bf16.xpose.msra.mxu0 0
        %1151 = vmatprep.subr.bf16.mxu0 0
        %1152 = vmatpush1.bf16.xpose.msra.mxu0 0
        %1153 = vmatprep.subr.bf16.mxu0 0
        %1154 = vmatpush1.bf16.xpose.msra.mxu0 0
        %1155 = vmatprep.subr.bf16.mxu0 0
        %1156 = vmatpush1.bf16.xpose.msra.mxu0 0
        %1157 = vmatprep.subr.bf16.mxu0 0
        %1158 = vmatpush1.bf16.xpose.msra.mxu0 0
        %1159 = vmatprep.subr.bf16.mxu0 0
        %1160 = vmatpush1.bf16.xpose.msra.mxu0 0
        %1161 = vmatprep.subr.bf16.mxu0 0
        %1162 = vmatpush1.bf16.xpose.msra.mxu0 0
        %1163 = vmatprep.mubr.bf16.mxu0 0
        %1164 = vmatmul.mubr.bf16.gmra.mrb[0].mxu0 %v1126
        %v1165 = vpop.f32.mrb[0].mxu0
        %v1166 = vadd.f32 0.0, %v1165
        %v1167 = vpop.f32.mrb[0].mxu0
        %v1168 = vpop.f32.mrb[0].mxu0
        %v1169 = vadd.f32 0.0, %v1168
        %v1170 = vpop.f32.mrb[0].mxu0
        %1171 = vdwg.mxu0
        %v1172 = vmul.f32 %v1166, 0.17677669
        %v1173 = vmul.f32 %v1169, 0.17677669
        %v1174 = vsel %vm503, %v1172, -inf
        %1175 = vmax.xlane.f32.xlu0 %v1174
        %v1176 = vpop.xlane.xlu0 %1175
        %v1177 = vsel %vm503, %v1173, -inf
        %1178 = vmax.xlane.f32.xlu0 %v1177
        %v1179 = vpop.xlane.xlu0 %1178
        %v1180 = vsub.f32 %v1172, %v1176
        %v1181 = vsub.f32 %v1173, %v1179
        %v1182 = vmul.f32 %v1180, 1.442695
        %v1183 = vpow.pop %v1182
        %v1184 = vmul.f32 %v1181, 1.442695
        %v1185 = vpow.pop %v1184
        %v1186 = vsel %vm503, %v1183, 0.0
        %1187 = vadd.xlane.f32.xlu0 %v1186
        %v1188 = vpop.xlane.xlu0 %1187
        %v1189 = vsel %vm503, %v1185, 0.0
        %1190 = vadd.xlane.f32.xlu0 %v1189
        %v1191 = vpop.xlane.xlu0 %1190
        %v1192 = vrcp.pop %v1188
        %v1193 = vrcp.pop %v1191
        %v1194 = vmul.f32 %v1183, %v1192
        %v1195 = vmul.f32 %v1185, %v1193
        %v1196 = vpack.c.bf16 %v1195, %v1194
        %v1197 = vpack.c.bf16 %v1115, %v1115
        %v1199 = vsel %vm503, %v1196, 0
        %v1202 = vsel %vm531, %v1197, 0
        %1204 = vmatprep.subr.bf16.mxu0 0
        %1205 = vmatpush1.bf16.msra.mxu0 %v1202
        %1206 = vmatprep.subr.bf16.mxu0 0
        %1207 = vmatpush1.bf16.msra.mxu0 0
        %1208 = vmatprep.subr.bf16.mxu0 0
        %1209 = vmatpush1.bf16.msra.mxu0 0
        %1210 = vmatprep.subr.bf16.mxu0 0
        %1211 = vmatpush1.bf16.msra.mxu0 0
        %1212 = vmatprep.subr.bf16.mxu0 0
        %1213 = vmatpush1.bf16.msra.mxu0 0
        %1214 = vmatprep.subr.bf16.mxu0 0
        %1215 = vmatpush1.bf16.msra.mxu0 0
        %1216 = vmatprep.subr.bf16.mxu0 0
        %1217 = vmatpush1.bf16.msra.mxu0 0
        %1218 = vmatprep.subr.bf16.mxu0 0
        %1219 = vmatpush1.bf16.msra.mxu0 0
        %1220 = vmatprep.subr.bf16.mxu0 0
        %1221 = vmatpush1.bf16.msra.mxu0 0
        %1222 = vmatprep.subr.bf16.mxu0 0
        %1223 = vmatpush1.bf16.msra.mxu0 0
        %1224 = vmatprep.subr.bf16.mxu0 0
        %1225 = vmatpush1.bf16.msra.mxu0 0
        %1226 = vmatprep.subr.bf16.mxu0 0
        %1227 = vmatpush1.bf16.msra.mxu0 0
        %1228 = vmatprep.subr.bf16.mxu0 0
        %1229 = vmatpush1.bf16.msra.mxu0 0
        %1230 = vmatprep.subr.bf16.mxu0 0
        %1231 = vmatpush1.bf16.msra.mxu0 0
        %1232 = vmatprep.subr.bf16.mxu0 0
        %1233 = vmatpush1.bf16.msra.mxu0 0
        %1234 = vmatprep.subr.bf16.mxu0 0
        %1235 = vmatpush1.bf16.msra.mxu0 0
        %1236 = vmatprep.mubr.bf16.mxu0 0
        %1237 = vmatmul.mubr.bf16.gmra.mrb[0].mxu0 %v1199
        %v1238 = vpop.f32.mrb[0].mxu0
        %v1239 = vadd.f32 0.0, %v1238
        %v1240 = vpop.f32.mrb[0].mxu0
        %v1241 = vpop.f32.mrb[0].mxu0
        %v1242 = vadd.f32 0.0, %v1241
        %v1243 = vpop.f32.mrb[0].mxu0
        %1244 = vdwg.mxu0
        %1247 = vrot.lane.b32.xlu0 %v793, 32
        %v1248 = vpop.permute.xlu0 %1247
        %1249 = vrot.lane.b32.xlu0 %v796, 32
        %v1250 = vpop.permute.xlu0 %1249
        %1255 = vrot.lane.b32.xlu0 %v1016, 64
        %v1256 = vpop.permute.xlu0 %1255
        %1257 = vrot.lane.b32.xlu0 %v1019, 64
        %v1258 = vpop.permute.xlu0 %1257
        %1263 = vrot.lane.b32.xlu0 %v1239, 96
        %v1264 = vpop.permute.xlu0 %1263
        %1265 = vrot.lane.b32.xlu0 %v1242, 96
        %v1266 = vpop.permute.xlu0 %1265
        %v1269 = vsel %vm453, %v570, %v1248
        %v1270 = vsel %vm453, %v573, %v1250
        %vm1271 = vcmask 523264
        %v1272 = vsel %vm1271, %v1269, %v1256
        %v1273 = vsel %vm1271, %v1270, %v1258
        %vm1274 = vcmask 785408
        %v1275 = vsel %vm1274, %v1272, %v1264
        %v1276 = vsel %vm1274, %v1273, %v1266
        %1277 = vst [vmem:[%s334] sm:$0xff] %v1275
        %1278 = vst [vmem:[%s334 + $0x8] sm:$0xff] %v1276
        %s1279 = sand.u32 %s158, 1
        %s1280 = scalar_lea.sflag [#allocation4], %s1279
        %s1281 = sand.u32 %s158, 1
        %s1282 = smul.addr %s1281, 16
        %s1283 = scalar_lea.vmem [#allocation8], %s1282
        // Predicated region
        $region53: #{tpu_custom_call.1} parent=39 // pred_check
          %p1284 = pneg %p168
        $region54: #{tpu_custom_call.1} parent=39 // pred_check_branch
          %1286 = sbr.rel (%p1284) target = $region56
        $region55: #{tpu_custom_call.1} parent=39 // pred_region
          %s1288 = ssub.s32 256, 256
          %1289 = vsyncadd %s1280, %s1288
          %s1290 = smul.addr %s25, 2
          %s1291 = smul.addr %s1290, 128
          %s1292 = scalar_lea.hbm %s5, %s1291
          %s1293 = sshll.u32 %s1283, 4
          %s1294 = int_to_ptr.vmem [resolvable:$true] %s1293
          %1299 = dma.vmem_to_hbm [thread:$0]  %s1294, 256, %s1292, %s1280, 128, 128, 8
        $region56: #{tpu_custom_call.1} parent=39 // pred_fallthru
          _
      $region40: #{tpu_custom_call.1} parent=5 // pred_fallthru
        _
      %p1300 = scmp.le.s32.totalorder 2, %s20
      // Predicated region
      $region57: #{tpu_custom_call.1} parent=5 // pred_check
        %p1301 = pneg %p1300
      $region58: #{tpu_custom_call.1} parent=5 // pred_check_branch
        %1303 = sbr.rel (%p1301) target = $region60
      $region59: #{tpu_custom_call.1} parent=5 // pred_region
        %s1304 = ssub.s32 %s20, 2
        // Predicated region
        $region61: #{tpu_custom_call.1} parent=59 // pred_check
          %p1305 = pneg %p174
        $region62: #{tpu_custom_call.1} parent=59 // pred_check_branch
          %1307 = sbr.rel (%p1305) target = $region64
        $region63: #{tpu_custom_call.1} parent=59 // pred_region
          %s1308 = sand.u32 %s159, 1
          %s1309 = scalar_lea.sflag [#allocation4], %s1308
          %s1310 = sand.u32 %s159, 1
          %s1311 = smul.addr %s1310, 16
          %s1312 = scalar_lea.vmem [#allocation8], %s1311
          %1313 = dma.done %s1309, 256
        $region64: #{tpu_custom_call.1} parent=59 // pred_fallthru
          _
      $region60: #{tpu_custom_call.1} parent=5 // pred_fallthru
        _
    $region6: #{tpu_custom_call.1} parent=1 // loop_footer
      %s24 = sadd.s32 1, %s20
    $region7: #{tpu_custom_call.1} parent=1 // loop_footer_branch
      %19 = sbr.rel target = $region3
    $region8: #{tpu_custom_call.1} parent=1 // loop_exit
      _
    %1314 = vsyncpa [#allocation3], 1
    %s1315 = scalar_lea.sflag [#allocation3], 1
    %1316 = vsyncpa %s1315, 1
    %1317 = vsyncpa [#allocation6], 1
    %s1318 = scalar_lea.sflag [#allocation6], 1
    %1319 = vsyncpa %s1318, 1
    %1320 = vsyncpa [#allocation4], 1
    %s1321 = scalar_lea.sflag [#allocation4], 1
    %1322 = vsyncpa %s1321, 1

</llo_original>
